<compile_context>
chip_gen: v7x
topology: tpu7x:2x2x1
jax: 0.10.0
libtpu: 0.0.40
codegen_flags: <defaults>
</compile_context>

<pallas_src>
import jax
import jax.numpy as jnp
from jax import lax
from jax.experimental import pallas as pl
from jax.experimental.pallas import tpu as pltpu


def _round_up(n, m):
    return ((n + m - 1) // m) * m


def _gru_chunk_kernel(x_ref, wx_ref, bx_ref, wfmh_ref, wch_ref,
                      hout_ref, h_ref, gx_ref):
    """One (batch_block, time_chunk) grid point of the GRU recurrence.

    x_ref    : (CHUNK, B_BLK, I_pad) f32   raw inputs (time-major)
    wx_ref   : (I_pad, 3*H_pad)      f32   fused [W_fx | W_mx | W_cx]
    bx_ref   : (1, 3*H_pad)          f32   fused [b_f | b_m | b_c]
    wfmh_ref : (H_pad, 2*H_pad)      bf16  fused [W_fh | W_mh]
    wch_ref  : (H_pad, H_pad)        f32   W_ch (tanh path kept in f32)
    hout_ref : (CHUNK, B_BLK, H_pad) f32   per-step hidden states (output)
    h_ref    : (B_BLK, H_pad)        f32   scratch, hidden carried across chunks
    gx_ref   : (CHUNK, B_BLK, 3*H_pad) f32 scratch, per-chunk x-side preacts
    """
    chunk, b_blk, i_pad = x_ref.shape
    h_pad = wch_ref.shape[0]

    # New batch block starts its time sweep: reset the hidden state.
    @pl.when(pl.program_id(1) == 0)
    def _():
        h_ref[...] = jnp.zeros_like(h_ref)

    # ---- x-side projection for the whole chunk, off the serial chain. ----
    # (CHUNK*B, I_pad) @ (I_pad, 3*H_pad): one lane-dense MXU matmul per chunk
    # instead of streaming a 3x-wide precomputed gx tensor through HBM.
    xc = x_ref[...].reshape(chunk * b_blk, i_pad)
    gx = jnp.dot(xc, wx_ref[...], preferred_element_type=jnp.float32)
    gx = gx + bx_ref[...]
    gx_ref[...] = gx.reshape(chunk, b_blk, 3 * h_pad)

    # ---- sequential recurrence over the chunk. ----
    def step(t, h):
        gxt = gx_ref[t]                                   # (B, 3H) f32

        # One fused MXU push for both sigmoid-gate h-projections (bf16 in,
        # f32 accumulate).  Weights are read from the resident VMEM block
        # inside the dot (not pinned in vregs across the loop).
        hm = jnp.dot(h.astype(jnp.bfloat16), wfmh_ref[...],
                     preferred_element_type=jnp.float32)  # (B, 2H)
        forget_gate = jax.nn.sigmoid(gxt[:, :h_pad] + hm[:, :h_pad])
        modulator_gate = jax.nn.sigmoid(gxt[:, h_pad:2 * h_pad] + hm[:, h_pad:])

        candidate_gate = jnp.tanh(
            gxt[:, 2 * h_pad:]
            + jnp.dot(h * modulator_gate, wch_ref[...],
                      preferred_element_type=jnp.float32))

        h_new = h * (1.0 - forget_gate) + forget_gate * candidate_gate
        hout_ref[t] = h_new
        return h_new

    h_ref[...] = lax.fori_loop(0, chunk, step, h_ref[...], unroll=8)


def basket_gru_forward(x, params):
    """x: (batch, seq, input_dim) float32.  Returns (batch, seq, input_dim)."""
    B, T, I = x.shape
    H = params["W_fh"].shape[0]
    f32 = jnp.float32

    # Tiling / padding.  Zero padding is mathematically exact here (padded
    # weight rows/cols are zero, padded hidden lanes stay zero) and is sliced
    # off in the wrapper.
    CHUNK = min(64, _round_up(T, 8))          # steps per grid point
    B_pad = _round_up(B, 8)                   # sublane tile
    if B_pad >= 16:                           # >=2 batch blocks -> both v7x TCs
        B_pad = _round_up(B_pad, 16)
        B_BLK = B_pad // 2
    else:
        B_BLK = B_pad
    H_pad = _round_up(H, 128)                 # lane tile
    I_pad = _round_up(I, 128)
    T_pad = _round_up(T, CHUNK)

    # ---- time-major, padded input stream (much smaller than the old gx). ----
    x_tm = jnp.transpose(x.astype(f32), (1, 0, 2))                    # (T, B, I)
    x_tm = jnp.pad(x_tm, ((0, T_pad - T), (0, B_pad - B), (0, I_pad - I)))

    # ---- fused, zero-padded weights. ----
    wx = jnp.zeros((I_pad, 3 * H_pad), f32)
    wx = wx.at[:I, 0 * H_pad:0 * H_pad + H].set(params["W_fx"])
    wx = wx.at[:I, 1 * H_pad:1 * H_pad + H].set(params["W_mx"])
    wx = wx.at[:I, 2 * H_pad:2 * H_pad + H].set(params["W_cx"])
    bx = jnp.zeros((1, 3 * H_pad), f32)
    bx = bx.at[0, 0 * H_pad:0 * H_pad + H].set(params["b_f"])
    bx = bx.at[0, 1 * H_pad:1 * H_pad + H].set(params["b_m"])
    bx = bx.at[0, 2 * H_pad:2 * H_pad + H].set(params["b_c"])

    w_fmh = jnp.zeros((H_pad, 2 * H_pad), f32)
    w_fmh = w_fmh.at[:H, :H].set(params["W_fh"])
    w_fmh = w_fmh.at[:H, H_pad:H_pad + H].set(params["W_mh"])
    w_fmh = w_fmh.astype(jnp.bfloat16)                 # sigmoid gates: bf16 ok
    w_ch = jnp.zeros((H_pad, H_pad), f32).at[:H, :H].set(params["W_ch"])  # f32

    grid = (B_pad // B_BLK, T_pad // CHUNK)

    # VMEM budget: double-buffered streamed blocks + constant weights + scratch.
    vmem_est = (
        2 * CHUNK * B_BLK * I_pad * 4          # x blocks
        + 2 * I_pad * 3 * H_pad * 4            # wx
        + 2 * 3 * H_pad * 4                    # bx
        + 2 * H_pad * 2 * H_pad * 2            # w_fmh (bf16)
        + 2 * H_pad * H_pad * 4                # w_ch
        + 2 * CHUNK * B_BLK * H_pad * 4        # hout blocks
        + B_BLK * H_pad * 4                    # h carry scratch
        + CHUNK * B_BLK * 3 * H_pad * 4        # gx scratch
    )
    vmem_limit = int(min(max(2 * vmem_est, 32 << 20), 100 << 20))

    h_all = pl.pallas_call(
        _gru_chunk_kernel,
        out_shape=jax.ShapeDtypeStruct((T_pad, B_pad, H_pad), f32),
        grid=grid,
        in_specs=[
            pl.BlockSpec((CHUNK, B_BLK, I_pad), lambda b, c: (c, b, 0)),
            pl.BlockSpec((I_pad, 3 * H_pad), lambda b, c: (0, 0)),
            pl.BlockSpec((1, 3 * H_pad), lambda b, c: (0, 0)),
            pl.BlockSpec((H_pad, 2 * H_pad), lambda b, c: (0, 0)),
            pl.BlockSpec((H_pad, H_pad), lambda b, c: (0, 0)),
        ],
        out_specs=pl.BlockSpec((CHUNK, B_BLK, H_pad), lambda b, c: (c, b, 0)),
        scratch_shapes=[
            pltpu.VMEM((B_BLK, H_pad), f32),              # hidden-state carry
            pltpu.VMEM((CHUNK, B_BLK, 3 * H_pad), f32),   # per-chunk gx
        ],
        compiler_params=pltpu.CompilerParams(
            dimension_semantics=("parallel", "arbitrary"),  # time stays sequential
            vmem_limit_bytes=vmem_limit),
    )(x_tm, wx, bx, w_fmh, w_ch)

    # ---- hoisted prediction head: one bulk matmul over all steps, folding the
    #      time-major -> batch-major transpose into the einsum. ----
    # NOTE: trailing padded time steps / batch rows carry meaningless values
    # and are sliced off here; any future track_hiddens output must mask them.
    h_real = h_all[:T, :B, :H]                                        # (T, B, H)
    pred = jax.nn.sigmoid(
        jnp.einsum("tbh,hi->bti", h_real, params["W_ph"]) + params["b_p"])
    return pred


def init_params(key, input_dim, num_hidden):
    """Deterministic xavier-uniform init matching the module's parameter shapes."""
    def xavier(k, shape):
        fan_in, fan_out = shape
        limit = jnp.sqrt(6.0 / (fan_in + fan_out))
        return jax.random.uniform(k, shape, jnp.float32, -limit, limit)

    ks = jax.random.split(key, 7)
    return {
        "W_fx": xavier(ks[0], (input_dim, num_hidden)),
        "W_fh": xavier(ks[1], (num_hidden, num_hidden)),
        "b_f": jnp.zeros((num_hidden,), jnp.float32),
        "W_mx": xavier(ks[2], (input_dim, num_hidden)),
        "W_mh": xavier(ks[3], (num_hidden, num_hidden)),
        "b_m": jnp.zeros((num_hidden,), jnp.float32),
        "W_cx": xavier(ks[4], (input_dim, num_hidden)),
        "W_ch": xavier(ks[5], (num_hidden, num_hidden)),
        "b_c": jnp.zeros((num_hidden,), jnp.float32),
        "W_ph": xavier(ks[6], (num_hidden, input_dim)),
        "b_p": jnp.zeros((input_dim,), jnp.float32),
    }


def basket_gru_reference(x, params):
    """Pure-JAX f32 reference of the PyTorch forward (no dropout, no track_hiddens)."""
    B, T, I = x.shape
    H = params["W_fh"].shape[0]
    h0 = jnp.zeros((B, H), jnp.float32)

    def step(h, xt):
        f = jax.nn.sigmoid(xt @ params["W_fx"] + h @ params["W_fh"] + params["b_f"])
        m = jax.nn.sigmoid(xt @ params["W_mx"] + h @ params["W_mh"] + params["b_m"])
        c = jnp.tanh(xt @ params["W_cx"] + (h * m) @ params["W_ch"] + params["b_c"])
        h_new = h * (1.0 - f) + f * c
        pred = jax.nn.sigmoid(h_new @ params["W_ph"] + params["b_p"])
        return h_new, pred

    _, preds = jax.lax.scan(step, h0, jnp.transpose(x, (1, 0, 2)))
    return jnp.transpose(preds, (1, 0, 2))


if __name__ == "__main__":
    batch, seq_length, input_dim, num_hidden = 2, 8, 16, 32

    key = jax.random.PRNGKey(0)
    pkey, xkey = jax.random.split(key)
    params = init_params(pkey, input_dim, num_hidden)
    x = jax.random.bernoulli(
        xkey, 0.3, (batch, seq_length, input_dim)).astype(jnp.float32)

    out = jax.jit(basket_gru_forward)(x, params)
    out = jax.block_until_ready(out)

    ref = basket_gru_reference(x, params)
    assert out.shape == (batch, seq_length, input_dim)
    # The fused sigmoid-gate projection uses bf16 MXU inputs (f32 accumulation),
    # so outputs deviate from the pure-f32 reference at the ~1e-3 level.
    err = float(jnp.max(jnp.abs(out - ref)))
    assert jnp.allclose(out, ref, atol=2e-2, rtol=2e-2), err
    print("KERNEL_OK")
</pallas_src>

<mosaic_0001>
module attributes {stable_mosaic.version = 11 : i64} {
  func.func @_gru_chunk_kernel(%arg0: i32, %arg1: i32, %arg2: memref<8x8x128xf32, #tpu.memory_space<vmem>>, %arg3: memref<128x384xf32, #tpu.memory_space<vmem>>, %arg4: memref<1x384xf32, #tpu.memory_space<vmem>>, %arg5: memref<128x256xbf16, #tpu.memory_space<vmem>>, %arg6: memref<128x128xf32, #tpu.memory_space<vmem>>, %arg7: memref<8x8x128xf32, #tpu.memory_space<vmem>>, %arg8: memref<8x128xf32, #tpu.memory_space<vmem>>, %arg9: memref<8x8x384xf32, #tpu.memory_space<vmem>>) attributes {dimension_semantics = [#tpu.dimension_semantics<parallel>, #tpu.dimension_semantics<arbitrary>], iteration_bounds = array<i64: 1, 1>, scalar_prefetch = 0 : i64, scratch_operands = 2 : i64, tpu.core_type = #tpu.core_type<tc>, window_params = [{transform_indices = @transform_0, window_bounds = array<i64: 8, 8, 128>}, {pipeline_mode = #tpu.pipeline_mode<synchronous>, transform_indices = @transform_1, window_bounds = array<i64: 128, 384>}, {pipeline_mode = #tpu.pipeline_mode<synchronous>, transform_indices = @transform_2, window_bounds = array<i64: 1, 384>}, {pipeline_mode = #tpu.pipeline_mode<synchronous>, transform_indices = @transform_3, window_bounds = array<i64: 128, 256>}, {pipeline_mode = #tpu.pipeline_mode<synchronous>, transform_indices = @transform_4, window_bounds = array<i64: 128, 128>}, {transform_indices = @transform_5, window_bounds = array<i64: 8, 8, 128>}]} {
    %c0_i32 = arith.constant 0 : i32
    %0 = arith.cmpi eq, %arg1, %c0_i32 : i32
    %1 = arith.extui %0 : i1 to i32
    %c0_i32_0 = arith.constant 0 : i32
    %2 = arith.cmpi ne, %1, %c0_i32_0 : i32
    scf.if %2 {
      %cst_119 = arith.constant 0.000000e+00 : f32
      %310 = vector.broadcast %cst_119 : f32 to vector<8x128xf32>
      %c0_120 = arith.constant 0 : index
      %c0_121 = arith.constant 0 : index
      %311 = vector.load %arg8[%c0_120, %c0_121] : memref<8x128xf32, #tpu.memory_space<vmem>>, vector<8x128xf32>
      tpu.vector_store %arg8[%c0_120, %c0_121], %310 {strides = array<i32>} : memref<8x128xf32, #tpu.memory_space<vmem>>, vector<8x128xf32>,
    } else {
    }
    %c0 = arith.constant 0 : index
    %c0_1 = arith.constant 0 : index
    %c0_2 = arith.constant 0 : index
    %3 = vector.load %arg2[%c0, %c0_1, %c0_2] : memref<8x8x128xf32, #tpu.memory_space<vmem>>, vector<8x8x128xf32>
    %4 = vector.shape_cast %3 : vector<8x8x128xf32> to vector<64x128xf32>
    %c0_3 = arith.constant 0 : index
    %c0_4 = arith.constant 0 : index
    %5 = vector.load %arg3[%c0_3, %c0_4] : memref<128x384xf32, #tpu.memory_space<vmem>>, vector<128x384xf32>
    %cst = arith.constant dense<0.000000e+00> : vector<64x384xf32>
    %6 = tpu.matmul %4, %5, %cst {dimension_numbers = #tpu.dot_dimension_numbers<[1], [0], [0], [1], [0, 0, 1, 1], [], []>} : vector<64x128xf32>, vector<128x384xf32>, vector<64x384xf32> -> vector<64x384xf32>
    %c0_5 = arith.constant 0 : index
    %c0_6 = arith.constant 0 : index
    %7 = vector.load %arg4[%c0_5, %c0_6] : memref<1x384xf32, #tpu.memory_space<vmem>>, vector<1x384xf32>
    %8 = vector.broadcast %7 : vector<1x384xf32> to vector<64x384xf32>
    %9 = arith.addf %6, %8 : vector<64x384xf32>
    %10 = vector.shape_cast %9 : vector<64x384xf32> to vector<8x8x384xf32>
    %c0_7 = arith.constant 0 : index
    %c0_8 = arith.constant 0 : index
    %c0_9 = arith.constant 0 : index
    %11 = vector.load %arg9[%c0_7, %c0_8, %c0_9] : memref<8x8x384xf32, #tpu.memory_space<vmem>>, vector<8x8x384xf32>
    tpu.vector_store %arg9[%c0_7, %c0_8, %c0_9], %10 {strides = array<i32>} : memref<8x8x384xf32, #tpu.memory_space<vmem>>, vector<8x8x384xf32>,
    %c0_10 = arith.constant 0 : index
    %c0_11 = arith.constant 0 : index
    %12 = vector.load %arg8[%c0_10, %c0_11] : memref<8x128xf32, #tpu.memory_space<vmem>>, vector<8x128xf32>
    %c0_i32_12 = arith.constant 0 : i32
    %13 = arith.index_cast %c0_i32_12 : i32 to index
    %c0_13 = arith.constant 0 : index
    %c0_14 = arith.constant 0 : index
    %14 = vector.load %arg9[%13, %c0_13, %c0_14] : memref<8x8x384xf32, #tpu.memory_space<vmem>>, vector<1x8x384xf32>
    %15 = vector.shape_cast %14 : vector<1x8x384xf32> to vector<8x384xf32>
    %16 = arith.truncf %12 : vector<8x128xf32> to vector<8x128xbf16>
    %c0_15 = arith.constant 0 : index
    %c0_16 = arith.constant 0 : index
    %17 = vector.load %arg5[%c0_15, %c0_16] : memref<128x256xbf16, #tpu.memory_space<vmem>>, vector<128x256xbf16>
    %cst_17 = arith.constant dense<0.000000e+00> : vector<8x256xf32>
    %18 = tpu.matmul %16, %17, %cst_17 {dimension_numbers = #tpu.dot_dimension_numbers<[1], [0], [0], [1], [0, 0, 1, 1], [], []>} : vector<8x128xbf16>, vector<128x256xbf16>, vector<8x256xf32> -> vector<8x256xf32>
    %19 = vector.extract_strided_slice %15 {offsets = [0, 0], sizes = [8, 128], strides = [1, 1]} : vector<8x384xf32> to vector<8x128xf32>
    %20 = vector.extract_strided_slice %18 {offsets = [0, 0], sizes = [8, 128], strides = [1, 1]} : vector<8x256xf32> to vector<8x128xf32>
    %21 = arith.addf %19, %20 : vector<8x128xf32>
    %22 = arith.negf %21 : vector<8x128xf32>
    %23 = math.exp %22 : vector<8x128xf32>
    %cst_18 = arith.constant 1.000000e+00 : f32
    %24 = vector.broadcast %cst_18 : f32 to vector<8x128xf32>
    %25 = arith.addf %24, %23 : vector<8x128xf32>
    %26 = arith.divf %24, %25 : vector<8x128xf32>
    %27 = vector.extract_strided_slice %15 {offsets = [0, 128], sizes = [8, 128], strides = [1, 1]} : vector<8x384xf32> to vector<8x128xf32>
    %28 = vector.extract_strided_slice %18 {offsets = [0, 128], sizes = [8, 128], strides = [1, 1]} : vector<8x256xf32> to vector<8x128xf32>
    %29 = arith.addf %27, %28 : vector<8x128xf32>
    %30 = arith.negf %29 : vector<8x128xf32>
    %31 = math.exp %30 : vector<8x128xf32>
    %cst_19 = arith.constant 1.000000e+00 : f32
    %32 = vector.broadcast %cst_19 : f32 to vector<8x128xf32>
    %33 = arith.addf %32, %31 : vector<8x128xf32>
    %34 = arith.divf %32, %33 : vector<8x128xf32>
    %35 = vector.extract_strided_slice %15 {offsets = [0, 256], sizes = [8, 128], strides = [1, 1]} : vector<8x384xf32> to vector<8x128xf32>
    %36 = arith.mulf %12, %34 : vector<8x128xf32>
    %c0_20 = arith.constant 0 : index
    %c0_21 = arith.constant 0 : index
    %37 = vector.load %arg6[%c0_20, %c0_21] : memref<128x128xf32, #tpu.memory_space<vmem>>, vector<128x128xf32>
    %cst_22 = arith.constant dense<0.000000e+00> : vector<8x128xf32>
    %38 = tpu.matmul %36, %37, %cst_22 {dimension_numbers = #tpu.dot_dimension_numbers<[1], [0], [0], [1], [0, 0, 1, 1], [], []>} : vector<8x128xf32>, vector<128x128xf32>, vector<8x128xf32> -> vector<8x128xf32>
    %39 = arith.addf %35, %38 : vector<8x128xf32>
    %40 = math.tanh %39 : vector<8x128xf32>
    %cst_23 = arith.constant 1.000000e+00 : f32
    %41 = vector.broadcast %cst_23 : f32 to vector<8x128xf32>
    %42 = arith.subf %41, %26 : vector<8x128xf32>
    %43 = arith.mulf %12, %42 : vector<8x128xf32>
    %44 = arith.mulf %26, %40 : vector<8x128xf32>
    %45 = arith.addf %43, %44 : vector<8x128xf32>
    %46 = arith.index_cast %c0_i32_12 : i32 to index
    %c0_24 = arith.constant 0 : index
    %c0_25 = arith.constant 0 : index
    %47 = vector.load %arg7[%46, %c0_24, %c0_25] : memref<8x8x128xf32, #tpu.memory_space<vmem>>, vector<1x8x128xf32>
    %48 = vector.shape_cast %47 : vector<1x8x128xf32> to vector<8x128xf32>
    %49 = vector.shape_cast %45 : vector<8x128xf32> to vector<1x8x128xf32>
    tpu.vector_store %arg7[%46, %c0_24, %c0_25], %49 {strides = array<i32>} : memref<8x8x128xf32, #tpu.memory_space<vmem>>, vector<1x8x128xf32>,
    %c1_i32 = arith.constant 1 : i32
    %50 = arith.index_cast %c1_i32 : i32 to index
    %c0_26 = arith.constant 0 : index
    %c0_27 = arith.constant 0 : index
    %51 = vector.load %arg9[%50, %c0_26, %c0_27] : memref<8x8x384xf32, #tpu.memory_space<vmem>>, vector<1x8x384xf32>
    %52 = vector.shape_cast %51 : vector<1x8x384xf32> to vector<8x384xf32>
    %53 = arith.truncf %45 : vector<8x128xf32> to vector<8x128xbf16>
    %c0_28 = arith.constant 0 : index
    %c0_29 = arith.constant 0 : index
    %54 = vector.load %arg5[%c0_28, %c0_29] : memref<128x256xbf16, #tpu.memory_space<vmem>>, vector<128x256xbf16>
    %cst_30 = arith.constant dense<0.000000e+00> : vector<8x256xf32>
    %55 = tpu.matmul %53, %54, %cst_30 {dimension_numbers = #tpu.dot_dimension_numbers<[1], [0], [0], [1], [0, 0, 1, 1], [], []>} : vector<8x128xbf16>, vector<128x256xbf16>, vector<8x256xf32> -> vector<8x256xf32>
    %56 = vector.extract_strided_slice %52 {offsets = [0, 0], sizes = [8, 128], strides = [1, 1]} : vector<8x384xf32> to vector<8x128xf32>
    %57 = vector.extract_strided_slice %55 {offsets = [0, 0], sizes = [8, 128], strides = [1, 1]} : vector<8x256xf32> to vector<8x128xf32>
    %58 = arith.addf %56, %57 : vector<8x128xf32>
    %59 = arith.negf %58 : vector<8x128xf32>
    %60 = math.exp %59 : vector<8x128xf32>
    %cst_31 = arith.constant 1.000000e+00 : f32
    %61 = vector.broadcast %cst_31 : f32 to vector<8x128xf32>
    %62 = arith.addf %61, %60 : vector<8x128xf32>
    %63 = arith.divf %61, %62 : vector<8x128xf32>
    %64 = vector.extract_strided_slice %52 {offsets = [0, 128], sizes = [8, 128], strides = [1, 1]} : vector<8x384xf32> to vector<8x128xf32>
    %65 = vector.extract_strided_slice %55 {offsets = [0, 128], sizes = [8, 128], strides = [1, 1]} : vector<8x256xf32> to vector<8x128xf32>
    %66 = arith.addf %64, %65 : vector<8x128xf32>
    %67 = arith.negf %66 : vector<8x128xf32>
    %68 = math.exp %67 : vector<8x128xf32>
    %cst_32 = arith.constant 1.000000e+00 : f32
    %69 = vector.broadcast %cst_32 : f32 to vector<8x128xf32>
    %70 = arith.addf %69, %68 : vector<8x128xf32>
    %71 = arith.divf %69, %70 : vector<8x128xf32>
    %72 = vector.extract_strided_slice %52 {offsets = [0, 256], sizes = [8, 128], strides = [1, 1]} : vector<8x384xf32> to vector<8x128xf32>
    %73 = arith.mulf %45, %71 : vector<8x128xf32>
    %c0_33 = arith.constant 0 : index
    %c0_34 = arith.constant 0 : index
    %74 = vector.load %arg6[%c0_33, %c0_34] : memref<128x128xf32, #tpu.memory_space<vmem>>, vector<128x128xf32>
    %cst_35 = arith.constant dense<0.000000e+00> : vector<8x128xf32>
    %75 = tpu.matmul %73, %74, %cst_35 {dimension_numbers = #tpu.dot_dimension_numbers<[1], [0], [0], [1], [0, 0, 1, 1], [], []>} : vector<8x128xf32>, vector<128x128xf32>, vector<8x128xf32> -> vector<8x128xf32>
    %76 = arith.addf %72, %75 : vector<8x128xf32>
    %77 = math.tanh %76 : vector<8x128xf32>
    %cst_36 = arith.constant 1.000000e+00 : f32
    %78 = vector.broadcast %cst_36 : f32 to vector<8x128xf32>
    %79 = arith.subf %78, %63 : vector<8x128xf32>
    %80 = arith.mulf %45, %79 : vector<8x128xf32>
    %81 = arith.mulf %63, %77 : vector<8x128xf32>
    %82 = arith.addf %80, %81 : vector<8x128xf32>
    %83 = arith.index_cast %c1_i32 : i32 to index
    %c0_37 = arith.constant 0 : index
    %c0_38 = arith.constant 0 : index
    %84 = vector.load %arg7[%83, %c0_37, %c0_38] : memref<8x8x128xf32, #tpu.memory_space<vmem>>, vector<1x8x128xf32>
    %85 = vector.shape_cast %84 : vector<1x8x128xf32> to vector<8x128xf32>
    %86 = vector.shape_cast %82 : vector<8x128xf32> to vector<1x8x128xf32>
    tpu.vector_store %arg7[%83, %c0_37, %c0_38], %86 {strides = array<i32>} : memref<8x8x128xf32, #tpu.memory_space<vmem>>, vector<1x8x128xf32>,
    %c2_i32 = arith.constant 2 : i32
    %87 = arith.index_cast %c2_i32 : i32 to index
    %c0_39 = arith.constant 0 : index
    %c0_40 = arith.constant 0 : index
    %88 = vector.load %arg9[%87, %c0_39, %c0_40] : memref<8x8x384xf32, #tpu.memory_space<vmem>>, vector<1x8x384xf32>
    %89 = vector.shape_cast %88 : vector<1x8x384xf32> to vector<8x384xf32>
    %90 = arith.truncf %82 : vector<8x128xf32> to vector<8x128xbf16>
    %c0_41 = arith.constant 0 : index
    %c0_42 = arith.constant 0 : index
    %91 = vector.load %arg5[%c0_41, %c0_42] : memref<128x256xbf16, #tpu.memory_space<vmem>>, vector<128x256xbf16>
    %cst_43 = arith.constant dense<0.000000e+00> : vector<8x256xf32>
    %92 = tpu.matmul %90, %91, %cst_43 {dimension_numbers = #tpu.dot_dimension_numbers<[1], [0], [0], [1], [0, 0, 1, 1], [], []>} : vector<8x128xbf16>, vector<128x256xbf16>, vector<8x256xf32> -> vector<8x256xf32>
    %93 = vector.extract_strided_slice %89 {offsets = [0, 0], sizes = [8, 128], strides = [1, 1]} : vector<8x384xf32> to vector<8x128xf32>
    %94 = vector.extract_strided_slice %92 {offsets = [0, 0], sizes = [8, 128], strides = [1, 1]} : vector<8x256xf32> to vector<8x128xf32>
    %95 = arith.addf %93, %94 : vector<8x128xf32>
    %96 = arith.negf %95 : vector<8x128xf32>
    %97 = math.exp %96 : vector<8x128xf32>
    %cst_44 = arith.constant 1.000000e+00 : f32
    %98 = vector.broadcast %cst_44 : f32 to vector<8x128xf32>
    %99 = arith.addf %98, %97 : vector<8x128xf32>
    %100 = arith.divf %98, %99 : vector<8x128xf32>
    %101 = vector.extract_strided_slice %89 {offsets = [0, 128], sizes = [8, 128], strides = [1, 1]} : vector<8x384xf32> to vector<8x128xf32>
    %102 = vector.extract_strided_slice %92 {offsets = [0, 128], sizes = [8, 128], strides = [1, 1]} : vector<8x256xf32> to vector<8x128xf32>
    %103 = arith.addf %101, %102 : vector<8x128xf32>
    %104 = arith.negf %103 : vector<8x128xf32>
    %105 = math.exp %104 : vector<8x128xf32>
    %cst_45 = arith.constant 1.000000e+00 : f32
    %106 = vector.broadcast %cst_45 : f32 to vector<8x128xf32>
    %107 = arith.addf %106, %105 : vector<8x128xf32>
    %108 = arith.divf %106, %107 : vector<8x128xf32>
    %109 = vector.extract_strided_slice %89 {offsets = [0, 256], sizes = [8, 128], strides = [1, 1]} : vector<8x384xf32> to vector<8x128xf32>
    %110 = arith.mulf %82, %108 : vector<8x128xf32>
    %c0_46 = arith.constant 0 : index
    %c0_47 = arith.constant 0 : index
    %111 = vector.load %arg6[%c0_46, %c0_47] : memref<128x128xf32, #tpu.memory_space<vmem>>, vector<128x128xf32>
    %cst_48 = arith.constant dense<0.000000e+00> : vector<8x128xf32>
    %112 = tpu.matmul %110, %111, %cst_48 {dimension_numbers = #tpu.dot_dimension_numbers<[1], [0], [0], [1], [0, 0, 1, 1], [], []>} : vector<8x128xf32>, vector<128x128xf32>, vector<8x128xf32> -> vector<8x128xf32>
    %113 = arith.addf %109, %112 : vector<8x128xf32>
    %114 = math.tanh %113 : vector<8x128xf32>
    %cst_49 = arith.constant 1.000000e+00 : f32
    %115 = vector.broadcast %cst_49 : f32 to vector<8x128xf32>
    %116 = arith.subf %115, %100 : vector<8x128xf32>
    %117 = arith.mulf %82, %116 : vector<8x128xf32>
    %118 = arith.mulf %100, %114 : vector<8x128xf32>
    %119 = arith.addf %117, %118 : vector<8x128xf32>
    %120 = arith.index_cast %c2_i32 : i32 to index
    %c0_50 = arith.constant 0 : index
    %c0_51 = arith.constant 0 : index
    %121 = vector.load %arg7[%120, %c0_50, %c0_51] : memref<8x8x128xf32, #tpu.memory_space<vmem>>, vector<1x8x128xf32>
    %122 = vector.shape_cast %121 : vector<1x8x128xf32> to vector<8x128xf32>
    %123 = vector.shape_cast %119 : vector<8x128xf32> to vector<1x8x128xf32>
    tpu.vector_store %arg7[%120, %c0_50, %c0_51], %123 {strides = array<i32>} : memref<8x8x128xf32, #tpu.memory_space<vmem>>, vector<1x8x128xf32>,
    %c3_i32 = arith.constant 3 : i32
    %124 = arith.index_cast %c3_i32 : i32 to index
    %c0_52 = arith.constant 0 : index
    %c0_53 = arith.constant 0 : index
    %125 = vector.load %arg9[%124, %c0_52, %c0_53] : memref<8x8x384xf32, #tpu.memory_space<vmem>>, vector<1x8x384xf32>
    %126 = vector.shape_cast %125 : vector<1x8x384xf32> to vector<8x384xf32>
    %127 = arith.truncf %119 : vector<8x128xf32> to vector<8x128xbf16>
    %c0_54 = arith.constant 0 : index
    %c0_55 = arith.constant 0 : index
    %128 = vector.load %arg5[%c0_54, %c0_55] : memref<128x256xbf16, #tpu.memory_space<vmem>>, vector<128x256xbf16>
    %cst_56 = arith.constant dense<0.000000e+00> : vector<8x256xf32>
    %129 = tpu.matmul %127, %128, %cst_56 {dimension_numbers = #tpu.dot_dimension_numbers<[1], [0], [0], [1], [0, 0, 1, 1], [], []>} : vector<8x128xbf16>, vector<128x256xbf16>, vector<8x256xf32> -> vector<8x256xf32>
    %130 = vector.extract_strided_slice %126 {offsets = [0, 0], sizes = [8, 128], strides = [1, 1]} : vector<8x384xf32> to vector<8x128xf32>
    %131 = vector.extract_strided_slice %129 {offsets = [0, 0], sizes = [8, 128], strides = [1, 1]} : vector<8x256xf32> to vector<8x128xf32>
    %132 = arith.addf %130, %131 : vector<8x128xf32>
    %133 = arith.negf %132 : vector<8x128xf32>
    %134 = math.exp %133 : vector<8x128xf32>
    %cst_57 = arith.constant 1.000000e+00 : f32
    %135 = vector.broadcast %cst_57 : f32 to vector<8x128xf32>
    %136 = arith.addf %135, %134 : vector<8x128xf32>
    %137 = arith.divf %135, %136 : vector<8x128xf32>
    %138 = vector.extract_strided_slice %126 {offsets = [0, 128], sizes = [8, 128], strides = [1, 1]} : vector<8x384xf32> to vector<8x128xf32>
    %139 = vector.extract_strided_slice %129 {offsets = [0, 128], sizes = [8, 128], strides = [1, 1]} : vector<8x256xf32> to vector<8x128xf32>
    %140 = arith.addf %138, %139 : vector<8x128xf32>
    %141 = arith.negf %140 : vector<8x128xf32>
    %142 = math.exp %141 : vector<8x128xf32>
    %cst_58 = arith.constant 1.000000e+00 : f32
    %143 = vector.broadcast %cst_58 : f32 to vector<8x128xf32>
    %144 = arith.addf %143, %142 : vector<8x128xf32>
    %145 = arith.divf %143, %144 : vector<8x128xf32>
    %146 = vector.extract_strided_slice %126 {offsets = [0, 256], sizes = [8, 128], strides = [1, 1]} : vector<8x384xf32> to vector<8x128xf32>
    %147 = arith.mulf %119, %145 : vector<8x128xf32>
    %c0_59 = arith.constant 0 : index
    %c0_60 = arith.constant 0 : index
    %148 = vector.load %arg6[%c0_59, %c0_60] : memref<128x128xf32, #tpu.memory_space<vmem>>, vector<128x128xf32>
    %cst_61 = arith.constant dense<0.000000e+00> : vector<8x128xf32>
    %149 = tpu.matmul %147, %148, %cst_61 {dimension_numbers = #tpu.dot_dimension_numbers<[1], [0], [0], [1], [0, 0, 1, 1], [], []>} : vector<8x128xf32>, vector<128x128xf32>, vector<8x128xf32> -> vector<8x128xf32>
    %150 = arith.addf %146, %149 : vector<8x128xf32>
    %151 = math.tanh %150 : vector<8x128xf32>
    %cst_62 = arith.constant 1.000000e+00 : f32
    %152 = vector.broadcast %cst_62 : f32 to vector<8x128xf32>
    %153 = arith.subf %152, %137 : vector<8x128xf32>
    %154 = arith.mulf %119, %153 : vector<8x128xf32>
    %155 = arith.mulf %137, %151 : vector<8x128xf32>
    %156 = arith.addf %154, %155 : vector<8x128xf32>
    %157 = arith.index_cast %c3_i32 : i32 to index
    %c0_63 = arith.constant 0 : index
    %c0_64 = arith.constant 0 : index
    %158 = vector.load %arg7[%157, %c0_63, %c0_64] : memref<8x8x128xf32, #tpu.memory_space<vmem>>, vector<1x8x128xf32>
    %159 = vector.shape_cast %158 : vector<1x8x128xf32> to vector<8x128xf32>
    %160 = vector.shape_cast %156 : vector<8x128xf32> to vector<1x8x128xf32>
    tpu.vector_store %arg7[%157, %c0_63, %c0_64], %160 {strides = array<i32>} : memref<8x8x128xf32, #tpu.memory_space<vmem>>, vector<1x8x128xf32>,
    %c4_i32 = arith.constant 4 : i32
    %161 = arith.index_cast %c4_i32 : i32 to index
    %c0_65 = arith.constant 0 : index
    %c0_66 = arith.constant 0 : index
    %162 = vector.load %arg9[%161, %c0_65, %c0_66] : memref<8x8x384xf32, #tpu.memory_space<vmem>>, vector<1x8x384xf32>
    %163 = vector.shape_cast %162 : vector<1x8x384xf32> to vector<8x384xf32>
    %164 = arith.truncf %156 : vector<8x128xf32> to vector<8x128xbf16>
    %c0_67 = arith.constant 0 : index
    %c0_68 = arith.constant 0 : index
    %165 = vector.load %arg5[%c0_67, %c0_68] : memref<128x256xbf16, #tpu.memory_space<vmem>>, vector<128x256xbf16>
    %cst_69 = arith.constant dense<0.000000e+00> : vector<8x256xf32>
    %166 = tpu.matmul %164, %165, %cst_69 {dimension_numbers = #tpu.dot_dimension_numbers<[1], [0], [0], [1], [0, 0, 1, 1], [], []>} : vector<8x128xbf16>, vector<128x256xbf16>, vector<8x256xf32> -> vector<8x256xf32>
    %167 = vector.extract_strided_slice %163 {offsets = [0, 0], sizes = [8, 128], strides = [1, 1]} : vector<8x384xf32> to vector<8x128xf32>
    %168 = vector.extract_strided_slice %166 {offsets = [0, 0], sizes = [8, 128], strides = [1, 1]} : vector<8x256xf32> to vector<8x128xf32>
    %169 = arith.addf %167, %168 : vector<8x128xf32>
    %170 = arith.negf %169 : vector<8x128xf32>
    %171 = math.exp %170 : vector<8x128xf32>
    %cst_70 = arith.constant 1.000000e+00 : f32
    %172 = vector.broadcast %cst_70 : f32 to vector<8x128xf32>
    %173 = arith.addf %172, %171 : vector<8x128xf32>
    %174 = arith.divf %172, %173 : vector<8x128xf32>
    %175 = vector.extract_strided_slice %163 {offsets = [0, 128], sizes = [8, 128], strides = [1, 1]} : vector<8x384xf32> to vector<8x128xf32>
    %176 = vector.extract_strided_slice %166 {offsets = [0, 128], sizes = [8, 128], strides = [1, 1]} : vector<8x256xf32> to vector<8x128xf32>
    %177 = arith.addf %175, %176 : vector<8x128xf32>
    %178 = arith.negf %177 : vector<8x128xf32>
    %179 = math.exp %178 : vector<8x128xf32>
    %cst_71 = arith.constant 1.000000e+00 : f32
    %180 = vector.broadcast %cst_71 : f32 to vector<8x128xf32>
    %181 = arith.addf %180, %179 : vector<8x128xf32>
    %182 = arith.divf %180, %181 : vector<8x128xf32>
    %183 = vector.extract_strided_slice %163 {offsets = [0, 256], sizes = [8, 128], strides = [1, 1]} : vector<8x384xf32> to vector<8x128xf32>
    %184 = arith.mulf %156, %182 : vector<8x128xf32>
    %c0_72 = arith.constant 0 : index
    %c0_73 = arith.constant 0 : index
    %185 = vector.load %arg6[%c0_72, %c0_73] : memref<128x128xf32, #tpu.memory_space<vmem>>, vector<128x128xf32>
    %cst_74 = arith.constant dense<0.000000e+00> : vector<8x128xf32>
    %186 = tpu.matmul %184, %185, %cst_74 {dimension_numbers = #tpu.dot_dimension_numbers<[1], [0], [0], [1], [0, 0, 1, 1], [], []>} : vector<8x128xf32>, vector<128x128xf32>, vector<8x128xf32> -> vector<8x128xf32>
    %187 = arith.addf %183, %186 : vector<8x128xf32>
    %188 = math.tanh %187 : vector<8x128xf32>
    %cst_75 = arith.constant 1.000000e+00 : f32
    %189 = vector.broadcast %cst_75 : f32 to vector<8x128xf32>
    %190 = arith.subf %189, %174 : vector<8x128xf32>
    %191 = arith.mulf %156, %190 : vector<8x128xf32>
    %192 = arith.mulf %174, %188 : vector<8x128xf32>
    %193 = arith.addf %191, %192 : vector<8x128xf32>
    %194 = arith.index_cast %c4_i32 : i32 to index
    %c0_76 = arith.constant 0 : index
    %c0_77 = arith.constant 0 : index
    %195 = vector.load %arg7[%194, %c0_76, %c0_77] : memref<8x8x128xf32, #tpu.memory_space<vmem>>, vector<1x8x128xf32>
    %196 = vector.shape_cast %195 : vector<1x8x128xf32> to vector<8x128xf32>
    %197 = vector.shape_cast %193 : vector<8x128xf32> to vector<1x8x128xf32>
    tpu.vector_store %arg7[%194, %c0_76, %c0_77], %197 {strides = array<i32>} : memref<8x8x128xf32, #tpu.memory_space<vmem>>, vector<1x8x128xf32>,
    %c5_i32 = arith.constant 5 : i32
    %198 = arith.index_cast %c5_i32 : i32 to index
    %c0_78 = arith.constant 0 : index
    %c0_79 = arith.constant 0 : index
    %199 = vector.load %arg9[%198, %c0_78, %c0_79] : memref<8x8x384xf32, #tpu.memory_space<vmem>>, vector<1x8x384xf32>
    %200 = vector.shape_cast %199 : vector<1x8x384xf32> to vector<8x384xf32>
    %201 = arith.truncf %193 : vector<8x128xf32> to vector<8x128xbf16>
    %c0_80 = arith.constant 0 : index
    %c0_81 = arith.constant 0 : index
    %202 = vector.load %arg5[%c0_80, %c0_81] : memref<128x256xbf16, #tpu.memory_space<vmem>>, vector<128x256xbf16>
    %cst_82 = arith.constant dense<0.000000e+00> : vector<8x256xf32>
    %203 = tpu.matmul %201, %202, %cst_82 {dimension_numbers = #tpu.dot_dimension_numbers<[1], [0], [0], [1], [0, 0, 1, 1], [], []>} : vector<8x128xbf16>, vector<128x256xbf16>, vector<8x256xf32> -> vector<8x256xf32>
    %204 = vector.extract_strided_slice %200 {offsets = [0, 0], sizes = [8, 128], strides = [1, 1]} : vector<8x384xf32> to vector<8x128xf32>
    %205 = vector.extract_strided_slice %203 {offsets = [0, 0], sizes = [8, 128], strides = [1, 1]} : vector<8x256xf32> to vector<8x128xf32>
    %206 = arith.addf %204, %205 : vector<8x128xf32>
    %207 = arith.negf %206 : vector<8x128xf32>
    %208 = math.exp %207 : vector<8x128xf32>
    %cst_83 = arith.constant 1.000000e+00 : f32
    %209 = vector.broadcast %cst_83 : f32 to vector<8x128xf32>
    %210 = arith.addf %209, %208 : vector<8x128xf32>
    %211 = arith.divf %209, %210 : vector<8x128xf32>
    %212 = vector.extract_strided_slice %200 {offsets = [0, 128], sizes = [8, 128], strides = [1, 1]} : vector<8x384xf32> to vector<8x128xf32>
    %213 = vector.extract_strided_slice %203 {offsets = [0, 128], sizes = [8, 128], strides = [1, 1]} : vector<8x256xf32> to vector<8x128xf32>
    %214 = arith.addf %212, %213 : vector<8x128xf32>
    %215 = arith.negf %214 : vector<8x128xf32>
    %216 = math.exp %215 : vector<8x128xf32>
    %cst_84 = arith.constant 1.000000e+00 : f32
    %217 = vector.broadcast %cst_84 : f32 to vector<8x128xf32>
    %218 = arith.addf %217, %216 : vector<8x128xf32>
    %219 = arith.divf %217, %218 : vector<8x128xf32>
    %220 = vector.extract_strided_slice %200 {offsets = [0, 256], sizes = [8, 128], strides = [1, 1]} : vector<8x384xf32> to vector<8x128xf32>
    %221 = arith.mulf %193, %219 : vector<8x128xf32>
    %c0_85 = arith.constant 0 : index
    %c0_86 = arith.constant 0 : index
    %222 = vector.load %arg6[%c0_85, %c0_86] : memref<128x128xf32, #tpu.memory_space<vmem>>, vector<128x128xf32>
    %cst_87 = arith.constant dense<0.000000e+00> : vector<8x128xf32>
    %223 = tpu.matmul %221, %222, %cst_87 {dimension_numbers = #tpu.dot_dimension_numbers<[1], [0], [0], [1], [0, 0, 1, 1], [], []>} : vector<8x128xf32>, vector<128x128xf32>, vector<8x128xf32> -> vector<8x128xf32>
    %224 = arith.addf %220, %223 : vector<8x128xf32>
    %225 = math.tanh %224 : vector<8x128xf32>
    %cst_88 = arith.constant 1.000000e+00 : f32
    %226 = vector.broadcast %cst_88 : f32 to vector<8x128xf32>
    %227 = arith.subf %226, %211 : vector<8x128xf32>
    %228 = arith.mulf %193, %227 : vector<8x128xf32>
    %229 = arith.mulf %211, %225 : vector<8x128xf32>
    %230 = arith.addf %228, %229 : vector<8x128xf32>
    %231 = arith.index_cast %c5_i32 : i32 to index
    %c0_89 = arith.constant 0 : index
    %c0_90 = arith.constant 0 : index
    %232 = vector.load %arg7[%231, %c0_89, %c0_90] : memref<8x8x128xf32, #tpu.memory_space<vmem>>, vector<1x8x128xf32>
    %233 = vector.shape_cast %232 : vector<1x8x128xf32> to vector<8x128xf32>
    %234 = vector.shape_cast %230 : vector<8x128xf32> to vector<1x8x128xf32>
    tpu.vector_store %arg7[%231, %c0_89, %c0_90], %234 {strides = array<i32>} : memref<8x8x128xf32, #tpu.memory_space<vmem>>, vector<1x8x128xf32>,
    %c6_i32 = arith.constant 6 : i32
    %235 = arith.index_cast %c6_i32 : i32 to index
    %c0_91 = arith.constant 0 : index
    %c0_92 = arith.constant 0 : index
    %236 = vector.load %arg9[%235, %c0_91, %c0_92] : memref<8x8x384xf32, #tpu.memory_space<vmem>>, vector<1x8x384xf32>
    %237 = vector.shape_cast %236 : vector<1x8x384xf32> to vector<8x384xf32>
    %238 = arith.truncf %230 : vector<8x128xf32> to vector<8x128xbf16>
    %c0_93 = arith.constant 0 : index
    %c0_94 = arith.constant 0 : index
    %239 = vector.load %arg5[%c0_93, %c0_94] : memref<128x256xbf16, #tpu.memory_space<vmem>>, vector<128x256xbf16>
    %cst_95 = arith.constant dense<0.000000e+00> : vector<8x256xf32>
    %240 = tpu.matmul %238, %239, %cst_95 {dimension_numbers = #tpu.dot_dimension_numbers<[1], [0], [0], [1], [0, 0, 1, 1], [], []>} : vector<8x128xbf16>, vector<128x256xbf16>, vector<8x256xf32> -> vector<8x256xf32>
    %241 = vector.extract_strided_slice %237 {offsets = [0, 0], sizes = [8, 128], strides = [1, 1]} : vector<8x384xf32> to vector<8x128xf32>
    %242 = vector.extract_strided_slice %240 {offsets = [0, 0], sizes = [8, 128], strides = [1, 1]} : vector<8x256xf32> to vector<8x128xf32>
    %243 = arith.addf %241, %242 : vector<8x128xf32>
    %244 = arith.negf %243 : vector<8x128xf32>
    %245 = math.exp %244 : vector<8x128xf32>
    %cst_96 = arith.constant 1.000000e+00 : f32
    %246 = vector.broadcast %cst_96 : f32 to vector<8x128xf32>
    %247 = arith.addf %246, %245 : vector<8x128xf32>
    %248 = arith.divf %246, %247 : vector<8x128xf32>
    %249 = vector.extract_strided_slice %237 {offsets = [0, 128], sizes = [8, 128], strides = [1, 1]} : vector<8x384xf32> to vector<8x128xf32>
    %250 = vector.extract_strided_slice %240 {offsets = [0, 128], sizes = [8, 128], strides = [1, 1]} : vector<8x256xf32> to vector<8x128xf32>
    %251 = arith.addf %249, %250 : vector<8x128xf32>
    %252 = arith.negf %251 : vector<8x128xf32>
    %253 = math.exp %252 : vector<8x128xf32>
    %cst_97 = arith.constant 1.000000e+00 : f32
    %254 = vector.broadcast %cst_97 : f32 to vector<8x128xf32>
    %255 = arith.addf %254, %253 : vector<8x128xf32>
    %256 = arith.divf %254, %255 : vector<8x128xf32>
    %257 = vector.extract_strided_slice %237 {offsets = [0, 256], sizes = [8, 128], strides = [1, 1]} : vector<8x384xf32> to vector<8x128xf32>
    %258 = arith.mulf %230, %256 : vector<8x128xf32>
    %c0_98 = arith.constant 0 : index
    %c0_99 = arith.constant 0 : index
    %259 = vector.load %arg6[%c0_98, %c0_99] : memref<128x128xf32, #tpu.memory_space<vmem>>, vector<128x128xf32>
    %cst_100 = arith.constant dense<0.000000e+00> : vector<8x128xf32>
    %260 = tpu.matmul %258, %259, %cst_100 {dimension_numbers = #tpu.dot_dimension_numbers<[1], [0], [0], [1], [0, 0, 1, 1], [], []>} : vector<8x128xf32>, vector<128x128xf32>, vector<8x128xf32> -> vector<8x128xf32>
    %261 = arith.addf %257, %260 : vector<8x128xf32>
    %262 = math.tanh %261 : vector<8x128xf32>
    %cst_101 = arith.constant 1.000000e+00 : f32
    %263 = vector.broadcast %cst_101 : f32 to vector<8x128xf32>
    %264 = arith.subf %263, %248 : vector<8x128xf32>
    %265 = arith.mulf %230, %264 : vector<8x128xf32>
    %266 = arith.mulf %248, %262 : vector<8x128xf32>
    %267 = arith.addf %265, %266 : vector<8x128xf32>
    %268 = arith.index_cast %c6_i32 : i32 to index
    %c0_102 = arith.constant 0 : index
    %c0_103 = arith.constant 0 : index
    %269 = vector.load %arg7[%268, %c0_102, %c0_103] : memref<8x8x128xf32, #tpu.memory_space<vmem>>, vector<1x8x128xf32>
    %270 = vector.shape_cast %269 : vector<1x8x128xf32> to vector<8x128xf32>
    %271 = vector.shape_cast %267 : vector<8x128xf32> to vector<1x8x128xf32>
    tpu.vector_store %arg7[%268, %c0_102, %c0_103], %271 {strides = array<i32>} : memref<8x8x128xf32, #tpu.memory_space<vmem>>, vector<1x8x128xf32>,
    %c7_i32 = arith.constant 7 : i32
    %272 = arith.index_cast %c7_i32 : i32 to index
    %c0_104 = arith.constant 0 : index
    %c0_105 = arith.constant 0 : index
    %273 = vector.load %arg9[%272, %c0_104, %c0_105] : memref<8x8x384xf32, #tpu.memory_space<vmem>>, vector<1x8x384xf32>
    %274 = vector.shape_cast %273 : vector<1x8x384xf32> to vector<8x384xf32>
    %275 = arith.truncf %267 : vector<8x128xf32> to vector<8x128xbf16>
    %c0_106 = arith.constant 0 : index
    %c0_107 = arith.constant 0 : index
    %276 = vector.load %arg5[%c0_106, %c0_107] : memref<128x256xbf16, #tpu.memory_space<vmem>>, vector<128x256xbf16>
    %cst_108 = arith.constant dense<0.000000e+00> : vector<8x256xf32>
    %277 = tpu.matmul %275, %276, %cst_108 {dimension_numbers = #tpu.dot_dimension_numbers<[1], [0], [0], [1], [0, 0, 1, 1], [], []>} : vector<8x128xbf16>, vector<128x256xbf16>, vector<8x256xf32> -> vector<8x256xf32>
    %278 = vector.extract_strided_slice %274 {offsets = [0, 0], sizes = [8, 128], strides = [1, 1]} : vector<8x384xf32> to vector<8x128xf32>
    %279 = vector.extract_strided_slice %277 {offsets = [0, 0], sizes = [8, 128], strides = [1, 1]} : vector<8x256xf32> to vector<8x128xf32>
    %280 = arith.addf %278, %279 : vector<8x128xf32>
    %281 = arith.negf %280 : vector<8x128xf32>
    %282 = math.exp %281 : vector<8x128xf32>
    %cst_109 = arith.constant 1.000000e+00 : f32
    %283 = vector.broadcast %cst_109 : f32 to vector<8x128xf32>
    %284 = arith.addf %283, %282 : vector<8x128xf32>
    %285 = arith.divf %283, %284 : vector<8x128xf32>
    %286 = vector.extract_strided_slice %274 {offsets = [0, 128], sizes = [8, 128], strides = [1, 1]} : vector<8x384xf32> to vector<8x128xf32>
    %287 = vector.extract_strided_slice %277 {offsets = [0, 128], sizes = [8, 128], strides = [1, 1]} : vector<8x256xf32> to vector<8x128xf32>
    %288 = arith.addf %286, %287 : vector<8x128xf32>
    %289 = arith.negf %288 : vector<8x128xf32>
    %290 = math.exp %289 : vector<8x128xf32>
    %cst_110 = arith.constant 1.000000e+00 : f32
    %291 = vector.broadcast %cst_110 : f32 to vector<8x128xf32>
    %292 = arith.addf %291, %290 : vector<8x128xf32>
    %293 = arith.divf %291, %292 : vector<8x128xf32>
    %294 = vector.extract_strided_slice %274 {offsets = [0, 256], sizes = [8, 128], strides = [1, 1]} : vector<8x384xf32> to vector<8x128xf32>
    %295 = arith.mulf %267, %293 : vector<8x128xf32>
    %c0_111 = arith.constant 0 : index
    %c0_112 = arith.constant 0 : index
    %296 = vector.load %arg6[%c0_111, %c0_112] : memref<128x128xf32, #tpu.memory_space<vmem>>, vector<128x128xf32>
    %cst_113 = arith.constant dense<0.000000e+00> : vector<8x128xf32>
    %297 = tpu.matmul %295, %296, %cst_113 {dimension_numbers = #tpu.dot_dimension_numbers<[1], [0], [0], [1], [0, 0, 1, 1], [], []>} : vector<8x128xf32>, vector<128x128xf32>, vector<8x128xf32> -> vector<8x128xf32>
    %298 = arith.addf %294, %297 : vector<8x128xf32>
    %299 = math.tanh %298 : vector<8x128xf32>
    %cst_114 = arith.constant 1.000000e+00 : f32
    %300 = vector.broadcast %cst_114 : f32 to vector<8x128xf32>
    %301 = arith.subf %300, %285 : vector<8x128xf32>
    %302 = arith.mulf %267, %301 : vector<8x128xf32>
    %303 = arith.mulf %285, %299 : vector<8x128xf32>
    %304 = arith.addf %302, %303 : vector<8x128xf32>
    %305 = arith.index_cast %c7_i32 : i32 to index
    %c0_115 = arith.constant 0 : index
    %c0_116 = arith.constant 0 : index
    %306 = vector.load %arg7[%305, %c0_115, %c0_116] : memref<8x8x128xf32, #tpu.memory_space<vmem>>, vector<1x8x128xf32>
    %307 = vector.shape_cast %306 : vector<1x8x128xf32> to vector<8x128xf32>
    %308 = vector.shape_cast %304 : vector<8x128xf32> to vector<1x8x128xf32>
    tpu.vector_store %arg7[%305, %c0_115, %c0_116], %308 {strides = array<i32>} : memref<8x8x128xf32, #tpu.memory_space<vmem>>, vector<1x8x128xf32>,
    %c8_i32 = arith.constant 8 : i32
    %c0_117 = arith.constant 0 : index
    %c0_118 = arith.constant 0 : index
    %309 = vector.load %arg8[%c0_117, %c0_118] : memref<8x128xf32, #tpu.memory_space<vmem>>, vector<8x128xf32>
    tpu.vector_store %arg8[%c0_117, %c0_118], %304 {strides = array<i32>} : memref<8x128xf32, #tpu.memory_space<vmem>>, vector<8x128xf32>,
    return
  }
  func.func @transform_0(%arg0: i32, %arg1: i32) -> (i32, i32, i32) {
    %c0_i32 = arith.constant 0 : i32
    %c0_i32_0 = arith.constant 0 : i32
    return %arg1, %arg0, %c0_i32 : i32, i32, i32
  }
  func.func @transform_1(%arg0: i32, %arg1: i32) -> (i32, i32) {
    %c0_i32 = arith.constant 0 : i32
    %c0_i32_0 = arith.constant 0 : i32
    %c0_i32_1 = arith.constant 0 : i32
    return %c0_i32, %c0_i32_0 : i32, i32
  }
  func.func @transform_2(%arg0: i32, %arg1: i32) -> (i32, i32) {
    %c0_i32 = arith.constant 0 : i32
    %c0_i32_0 = arith.constant 0 : i32
    %c0_i32_1 = arith.constant 0 : i32
    return %c0_i32, %c0_i32_0 : i32, i32
  }
  func.func @transform_3(%arg0: i32, %arg1: i32) -> (i32, i32) {
    %c0_i32 = arith.constant 0 : i32
    %c0_i32_0 = arith.constant 0 : i32
    %c0_i32_1 = arith.constant 0 : i32
    return %c0_i32, %c0_i32_0 : i32, i32
  }
  func.func @transform_4(%arg0: i32, %arg1: i32) -> (i32, i32) {
    %c0_i32 = arith.constant 0 : i32
    %c0_i32_0 = arith.constant 0 : i32
    %c0_i32_1 = arith.constant 0 : i32
    return %c0_i32, %c0_i32_0 : i32, i32
  }
  func.func @transform_5(%arg0: i32, %arg1: i32) -> (i32, i32, i32) {
    %c0_i32 = arith.constant 0 : i32
    %c0_i32_0 = arith.constant 0 : i32
    return %arg1, %arg0, %c0_i32 : i32, i32, i32
  }
}

</mosaic_0001>

<llo_original>
// kernel: basket_gru_forward.1
$region0: #{basket_gru_forward.1}
  #allocation0 [shape = 'u32[]', space=smem, size = 0x4, offset = 0x4, fixed_abs, tag = 'smem constant byte address 0x4 - core index']
  #allocation1 [shape = 'u32[144,128]{1,0:T(1,128)}', space=vmem, size = 0x12000, scoped, tag = 'internal scratch']
  #allocation2 [shape = 'f32[8,128]{1,0:T(8,128)}', space=vmem, size = 0x1000, scoped, tag = 'scratch operand']
  #allocation3 [shape = 'f32[8,8,384]{2,1,0:T(8,128)}', space=vmem, size = 0x18000, scoped, tag = 'scratch operand']
  %s0 = inlined_call_operand.vmem [shape: f32[8,8,128], index: 0, kind: input, shape index: {}]
  %s1 = inlined_call_operand.vmem [shape: f32[128,384], index: 1, kind: input, shape index: {}]
  %s2 = inlined_call_operand.vmem [shape: f32[1,384], index: 2, kind: input, shape index: {}]
  %s3 = inlined_call_operand.vmem [shape: bf16[128,256], index: 3, kind: input, shape index: {}]
  %s4 = inlined_call_operand.vmem [shape: f32[128,128], index: 4, kind: input, shape index: {}]
  %s5 = inlined_call_operand.vmem [shape: f32[8,8,128], index: 5, kind: output, shape index: {}]
  %s6 = sld [smem:[#allocation0]]
  $region34: #{basket_gru_forward.1} parent=0
    _
  %s8 = ssub.s32 1, %s6
  %s9 = scalar_select 0, %s8, %s6
  // Predicated region
  $region2: #{basket_gru_forward.1} parent=0 // pred_check
    _
  $region3: #{basket_gru_forward.1} parent=0 // pred_check_branch
    %11 = sbr.rel (0) target = $region5
  $region4: #{basket_gru_forward.1} parent=0 // pred_region
    _
  $region5: #{basket_gru_forward.1} parent=0 // pred_fallthru
    _
  // Predicated region
  $region6: #{basket_gru_forward.1} parent=0 // pred_check
    _
  $region7: #{basket_gru_forward.1} parent=0 // pred_check_branch
    %13 = sbr.rel (0) target = $region9
  $region8: #{basket_gru_forward.1} parent=0 // pred_region
    _
  $region9: #{basket_gru_forward.1} parent=0 // pred_fallthru
    _
  // Predicated region
  $region10: #{basket_gru_forward.1} parent=0 // pred_check
    _
  $region11: #{basket_gru_forward.1} parent=0 // pred_check_branch
    %15 = sbr.rel (0) target = $region13
  $region12: #{basket_gru_forward.1} parent=0 // pred_region
    _
  $region13: #{basket_gru_forward.1} parent=0 // pred_fallthru
    _
  // Predicated region
  $region14: #{basket_gru_forward.1} parent=0 // pred_check
    _
  $region15: #{basket_gru_forward.1} parent=0 // pred_check_branch
    %17 = sbr.rel (0) target = $region17
  $region16: #{basket_gru_forward.1} parent=0 // pred_region
    _
  $region17: #{basket_gru_forward.1} parent=0 // pred_fallthru
    _
  // Predicated region
  $region18: #{basket_gru_forward.1} parent=0 // pred_check
    _
  $region19: #{basket_gru_forward.1} parent=0 // pred_check_branch
    %19 = sbr.rel (0) target = $region21
  $region20: #{basket_gru_forward.1} parent=0 // pred_region
    _
  $region21: #{basket_gru_forward.1} parent=0 // pred_fallthru
    _
  %p21 = scmp.eq.s32.totalorder 0, 0
  // Predicated region
  $region22: #{basket_gru_forward.1} parent=0 // pred_check
    %p22 = pneg %p21
  $region23: #{basket_gru_forward.1} parent=0 // pred_check_branch
    %24 = sbr.rel (%p22) target = $region25
  $region24: #{basket_gru_forward.1} parent=0 // pred_region
    %25 = vst [vmem:[#allocation2] sm:$0xff] 0.0
  $region25: #{basket_gru_forward.1} parent=0 // pred_fallthru
    _
  %v26 = vld [vmem:[%s0] sm:$0xff]
  %v27 = vld [vmem:[%s0 + $0x8] sm:$0xff]
  %v28 = vld [vmem:[%s0 + $0x10] sm:$0xff]
  %v29 = vld [vmem:[%s0 + $0x18] sm:$0xff]
  %v30 = vld [vmem:[%s0 + $0x20] sm:$0xff]
  %v31 = vld [vmem:[%s0 + $0x28] sm:$0xff]
  %v32 = vld [vmem:[%s0 + $0x30] sm:$0xff]
  %v33 = vld [vmem:[%s0 + $0x38] sm:$0xff]
  %v34 = vld [vmem:[%s1] sm:$0xff]
  %v35 = vld [vmem:[%s1 + $0x8] sm:$0xff]
  %v36 = vld [vmem:[%s1 + $0x10] sm:$0xff]
  %v37 = vld [vmem:[%s1 + $0x18] sm:$0xff]
  %v38 = vld [vmem:[%s1 + $0x20] sm:$0xff]
  %v39 = vld [vmem:[%s1 + $0x28] sm:$0xff]
  %v40 = vld [vmem:[%s1 + $0x30] sm:$0xff]
  %v41 = vld [vmem:[%s1 + $0x38] sm:$0xff]
  %v42 = vld [vmem:[%s1 + $0x40] sm:$0xff]
  %v43 = vld [vmem:[%s1 + $0x48] sm:$0xff]
  %v44 = vld [vmem:[%s1 + $0x50] sm:$0xff]
  %v45 = vld [vmem:[%s1 + $0x58] sm:$0xff]
  %v46 = vld [vmem:[%s1 + $0x60] sm:$0xff]
  %v47 = vld [vmem:[%s1 + $0x68] sm:$0xff]
  %v48 = vld [vmem:[%s1 + $0x70] sm:$0xff]
  %v49 = vld [vmem:[%s1 + $0x78] sm:$0xff]
  %v50 = vld [vmem:[%s1 + $0x80] sm:$0xff]
  %v51 = vld [vmem:[%s1 + $0x88] sm:$0xff]
  %v52 = vld [vmem:[%s1 + $0x90] sm:$0xff]
  %v53 = vld [vmem:[%s1 + $0x98] sm:$0xff]
  %v54 = vld [vmem:[%s1 + $0xa0] sm:$0xff]
  %v55 = vld [vmem:[%s1 + $0xa8] sm:$0xff]
  %v56 = vld [vmem:[%s1 + $0xb0] sm:$0xff]
  %v57 = vld [vmem:[%s1 + $0xb8] sm:$0xff]
  %v58 = vld [vmem:[%s1 + $0xc0] sm:$0xff]
  %v59 = vld [vmem:[%s1 + $0xc8] sm:$0xff]
  %v60 = vld [vmem:[%s1 + $0xd0] sm:$0xff]
  %v61 = vld [vmem:[%s1 + $0xd8] sm:$0xff]
  %v62 = vld [vmem:[%s1 + $0xe0] sm:$0xff]
  %v63 = vld [vmem:[%s1 + $0xe8] sm:$0xff]
  %v64 = vld [vmem:[%s1 + $0xf0] sm:$0xff]
  %v65 = vld [vmem:[%s1 + $0xf8] sm:$0xff]
  %v66 = vld [vmem:[%s1 + $0x100] sm:$0xff]
  %v67 = vld [vmem:[%s1 + $0x108] sm:$0xff]
  %v68 = vld [vmem:[%s1 + $0x110] sm:$0xff]
  %v69 = vld [vmem:[%s1 + $0x118] sm:$0xff]
  %v70 = vld [vmem:[%s1 + $0x120] sm:$0xff]
  %v71 = vld [vmem:[%s1 + $0x128] sm:$0xff]
  %v72 = vld [vmem:[%s1 + $0x130] sm:$0xff]
  %v73 = vld [vmem:[%s1 + $0x138] sm:$0xff]
  %v74 = vld [vmem:[%s1 + $0x140] sm:$0xff]
  %v75 = vld [vmem:[%s1 + $0x148] sm:$0xff]
  %v76 = vld [vmem:[%s1 + $0x150] sm:$0xff]
  %v77 = vld [vmem:[%s1 + $0x158] sm:$0xff]
  %v78 = vld [vmem:[%s1 + $0x160] sm:$0xff]
  %v79 = vld [vmem:[%s1 + $0x168] sm:$0xff]
  %v80 = vld [vmem:[%s1 + $0x170] sm:$0xff]
  %v81 = vld [vmem:[%s1 + $0x178] sm:$0xff]
  %v82 = vld [vmem:[%s2] sm:$0x7]
  %v84 = vlaneseq
  %v85 = vshrl.u32 %v84, 7
  %v86 = vsub.s32 0, %v85
  %v87 = vrot.slane %v82, %v86
  %v88 = vlaneseq
  %v89 = vshrl.u32 %v88, 7
  %v90 = vsub.s32 1, %v89
  %v91 = vrot.slane %v82, %v90
  %v92 = vlaneseq
  %v93 = vshrl.u32 %v92, 7
  %v94 = vsub.s32 2, %v93
  %v95 = vrot.slane %v82, %v94
  %99 = vmatprep.subr.mxu0 %v35
  %100 = vmatpush1.msra.mxu0 %v34
  %101 = vmatprep.subr.mxu0 %v38
  %102 = vmatpush1.msra.mxu0 %v37
  %103 = vmatprep.subr.mxu0 %v41
  %104 = vmatpush1.msra.mxu0 %v40
  %105 = vmatprep.subr.mxu0 %v44
  %106 = vmatpush1.msra.mxu0 %v43
  %107 = vmatprep.subr.mxu0 %v47
  %108 = vmatpush1.msra.mxu0 %v46
  %109 = vmatprep.subr.mxu0 %v50
  %110 = vmatpush1.msra.mxu0 %v49
  %111 = vmatprep.subr.mxu0 %v53
  %112 = vmatpush1.msra.mxu0 %v52
  %113 = vmatprep.subr.mxu0 %v56
  %114 = vmatpush1.msra.mxu0 %v55
  %115 = vmatprep.subr.mxu0 %v59
  %116 = vmatpush1.msra.mxu0 %v58
  %117 = vmatprep.subr.mxu0 %v62
  %118 = vmatpush1.msra.mxu0 %v61
  %119 = vmatprep.subr.mxu0 %v65
  %120 = vmatpush1.msra.mxu0 %v64
  %121 = vmatprep.subr.mxu0 %v68
  %122 = vmatpush1.msra.mxu0 %v67
  %123 = vmatprep.subr.mxu0 %v71
  %124 = vmatpush1.msra.mxu0 %v70
  %125 = vmatprep.subr.mxu0 %v74
  %126 = vmatpush1.msra.mxu0 %v73
  %127 = vmatprep.subr.mxu0 %v77
  %128 = vmatpush1.msra.mxu0 %v76
  %129 = vmatprep.subr.mxu0 %v80
  %130 = vmatpush1.msra.mxu0 %v79
  %131 = vmatprep.subr.mxu0 0.0
  %132 = vmatpush1.msra.mxu0 0.0
  %133 = vmatprep.subr.mxu0 0.0
  %134 = vmatpush1.msra.mxu0 0.0
  %135 = vmatprep.subr.mxu0 0.0
  %136 = vmatpush1.msra.mxu0 0.0
  %137 = vmatprep.subr.mxu0 0.0
  %138 = vmatpush1.msra.mxu0 0.0
  %139 = vmatprep.subr.mxu0 0.0
  %140 = vmatpush1.msra.mxu0 0.0
  %141 = vmatprep.subr.mxu0 0.0
  %142 = vmatpush1.msra.mxu0 0.0
  %143 = vmatprep.subr.mxu0 0.0
  %144 = vmatpush1.msra.mxu0 0.0
  %145 = vmatprep.subr.mxu0 0.0
  %146 = vmatpush1.msra.mxu0 0.0
  %147 = vmatprep.subr.mxu0 0.0
  %148 = vmatpush1.msra.mxu0 0.0
  %149 = vmatprep.subr.mxu0 0.0
  %150 = vmatpush1.msra.mxu0 0.0
  %151 = vmatprep.subr.mxu0 0.0
  %152 = vmatpush1.msra.mxu0 0.0
  %153 = vmatprep.subr.mxu0 0.0
  %154 = vmatpush1.msra.mxu0 0.0
  %155 = vmatprep.subr.mxu0 0.0
  %156 = vmatpush1.msra.mxu0 0.0
  %157 = vmatprep.subr.mxu0 0.0
  %158 = vmatpush1.msra.mxu0 0.0
  %159 = vmatprep.subr.mxu0 0.0
  %160 = vmatpush1.msra.mxu0 0.0
  %161 = vmatprep.subr.mxu0 0.0
  %162 = vmatpush1.msra.mxu0 0.0
  %163 = vmatprep.mubr.f32.mxu0 0.0
  %164 = vmatmul.mubr.f32.gmra.mrb[0].mxu0 %v26
  %v165 = vpop.f32.mrb[0].mxu0
  %v166 = vadd.f32 %v87, %v165
  %v167 = vpop.f32.mrb[0].mxu0
  %v168 = vadd.f32 %v91, %v167
  %169 = vmatprep.mubr.f32.mxu0 0.0
  %170 = vmatmul.mubr.f32.gmra.mrb[0].mxu0 %v27
  %v171 = vpop.f32.mrb[0].mxu0
  %v172 = vadd.f32 %v87, %v171
  %v173 = vpop.f32.mrb[0].mxu0
  %v174 = vadd.f32 %v91, %v173
  %175 = vmatprep.mubr.f32.mxu0 0.0
  %176 = vmatmul.mubr.f32.gmra.mrb[0].mxu0 %v28
  %v177 = vpop.f32.mrb[0].mxu0
  %v178 = vadd.f32 %v87, %v177
  %v179 = vpop.f32.mrb[0].mxu0
  %v180 = vadd.f32 %v91, %v179
  %181 = vmatprep.mubr.f32.mxu0 0.0
  %182 = vmatmul.mubr.f32.gmra.mrb[0].mxu0 %v29
  %v183 = vpop.f32.mrb[0].mxu0
  %v184 = vadd.f32 %v87, %v183
  %v185 = vpop.f32.mrb[0].mxu0
  %v186 = vadd.f32 %v91, %v185
  %187 = vmatprep.mubr.f32.mxu0 0.0
  %188 = vmatmul.mubr.f32.gmra.mrb[0].mxu0 %v30
  %v189 = vpop.f32.mrb[0].mxu0
  %v190 = vadd.f32 %v87, %v189
  %v191 = vpop.f32.mrb[0].mxu0
  %v192 = vadd.f32 %v91, %v191
  %193 = vmatprep.mubr.f32.mxu0 0.0
  %194 = vmatmul.mubr.f32.gmra.mrb[0].mxu0 %v31
  %v195 = vpop.f32.mrb[0].mxu0
  %v196 = vadd.f32 %v87, %v195
  %v197 = vpop.f32.mrb[0].mxu0
  %v198 = vadd.f32 %v91, %v197
  %199 = vmatprep.mubr.f32.mxu0 0.0
  %200 = vmatmul.mubr.f32.gmra.mrb[0].mxu0 %v32
  %v201 = vpop.f32.mrb[0].mxu0
  %v202 = vadd.f32 %v87, %v201
  %v203 = vpop.f32.mrb[0].mxu0
  %v204 = vadd.f32 %v91, %v203
  %205 = vmatprep.mubr.f32.mxu0 0.0
  %206 = vmatmul.mubr.f32.gmra.mrb[0].mxu0 %v33
  %v207 = vpop.f32.mrb[0].mxu0
  %v208 = vadd.f32 %v87, %v207
  %v209 = vpop.f32.mrb[0].mxu0
  %v210 = vadd.f32 %v91, %v209
  %211 = vdwg.mxu0
  %212 = vmatprep.subr.mxu0 0.0
  %213 = vmatpush1.msra.mxu0 %v36
  %214 = vmatprep.subr.mxu0 0.0
  %215 = vmatpush1.msra.mxu0 %v39
  %216 = vmatprep.subr.mxu0 0.0
  %217 = vmatpush1.msra.mxu0 %v42
  %218 = vmatprep.subr.mxu0 0.0
  %219 = vmatpush1.msra.mxu0 %v45
  %220 = vmatprep.subr.mxu0 0.0
  %221 = vmatpush1.msra.mxu0 %v48
  %222 = vmatprep.subr.mxu0 0.0
  %223 = vmatpush1.msra.mxu0 %v51
  %224 = vmatprep.subr.mxu0 0.0
  %225 = vmatpush1.msra.mxu0 %v54
  %226 = vmatprep.subr.mxu0 0.0
  %227 = vmatpush1.msra.mxu0 %v57
  %228 = vmatprep.subr.mxu0 0.0
  %229 = vmatpush1.msra.mxu0 %v60
  %230 = vmatprep.subr.mxu0 0.0
  %231 = vmatpush1.msra.mxu0 %v63
  %232 = vmatprep.subr.mxu0 0.0
  %233 = vmatpush1.msra.mxu0 %v66
  %234 = vmatprep.subr.mxu0 0.0
  %235 = vmatpush1.msra.mxu0 %v69
  %236 = vmatprep.subr.mxu0 0.0
  %237 = vmatpush1.msra.mxu0 %v72
  %238 = vmatprep.subr.mxu0 0.0
  %239 = vmatpush1.msra.mxu0 %v75
  %240 = vmatprep.subr.mxu0 0.0
  %241 = vmatpush1.msra.mxu0 %v78
  %242 = vmatprep.subr.mxu0 0.0
  %243 = vmatpush1.msra.mxu0 %v81
  %244 = vmatprep.subr.mxu0 0.0
  %245 = vmatpush1.msra.mxu0 0.0
  %246 = vmatprep.subr.mxu0 0.0
  %247 = vmatpush1.msra.mxu0 0.0
  %248 = vmatprep.subr.mxu0 0.0
  %249 = vmatpush1.msra.mxu0 0.0
  %250 = vmatprep.subr.mxu0 0.0
  %251 = vmatpush1.msra.mxu0 0.0
  %252 = vmatprep.subr.mxu0 0.0
  %253 = vmatpush1.msra.mxu0 0.0
  %254 = vmatprep.subr.mxu0 0.0
  %255 = vmatpush1.msra.mxu0 0.0
  %256 = vmatprep.subr.mxu0 0.0
  %257 = vmatpush1.msra.mxu0 0.0
  %258 = vmatprep.subr.mxu0 0.0
  %259 = vmatpush1.msra.mxu0 0.0
  %260 = vmatprep.subr.mxu0 0.0
  %261 = vmatpush1.msra.mxu0 0.0
  %262 = vmatprep.subr.mxu0 0.0
  %263 = vmatpush1.msra.mxu0 0.0
  %264 = vmatprep.subr.mxu0 0.0
  %265 = vmatpush1.msra.mxu0 0.0
  %266 = vmatprep.subr.mxu0 0.0
  %267 = vmatpush1.msra.mxu0 0.0
  %268 = vmatprep.subr.mxu0 0.0
  %269 = vmatpush1.msra.mxu0 0.0
  %270 = vmatprep.subr.mxu0 0.0
  %271 = vmatpush1.msra.mxu0 0.0
  %272 = vmatprep.subr.mxu0 0.0
  %273 = vmatpush1.msra.mxu0 0.0
  %274 = vmatprep.subr.mxu0 0.0
  %275 = vmatpush1.msra.mxu0 0.0
  %276 = vmatprep.mubr.f32.mxu0 0.0
  %277 = vmatmul.mubr.f32.gmra.mrb[0].mxu0 %v26
  %v278 = vpop.f32.mrb[0].mxu0
  %v279 = vadd.f32 %v95, %v278
  %v280 = vpop.f32.mrb[0].mxu0
  %281 = vmatprep.mubr.f32.mxu0 0.0
  %282 = vmatmul.mubr.f32.gmra.mrb[0].mxu0 %v27
  %v283 = vpop.f32.mrb[0].mxu0
  %v284 = vadd.f32 %v95, %v283
  %v285 = vpop.f32.mrb[0].mxu0
  %286 = vmatprep.mubr.f32.mxu0 0.0
  %287 = vmatmul.mubr.f32.gmra.mrb[0].mxu0 %v28
  %v288 = vpop.f32.mrb[0].mxu0
  %v289 = vadd.f32 %v95, %v288
  %v290 = vpop.f32.mrb[0].mxu0
  %291 = vmatprep.mubr.f32.mxu0 0.0
  %292 = vmatmul.mubr.f32.gmra.mrb[0].mxu0 %v29
  %v293 = vpop.f32.mrb[0].mxu0
  %v294 = vadd.f32 %v95, %v293
  %v295 = vpop.f32.mrb[0].mxu0
  %296 = vmatprep.mubr.f32.mxu0 0.0
  %297 = vmatmul.mubr.f32.gmra.mrb[0].mxu0 %v30
  %v298 = vpop.f32.mrb[0].mxu0
  %v299 = vadd.f32 %v95, %v298
  %v300 = vpop.f32.mrb[0].mxu0
  %301 = vmatprep.mubr.f32.mxu0 0.0
  %302 = vmatmul.mubr.f32.gmra.mrb[0].mxu0 %v31
  %v303 = vpop.f32.mrb[0].mxu0
  %v304 = vadd.f32 %v95, %v303
  %v305 = vpop.f32.mrb[0].mxu0
  %306 = vmatprep.mubr.f32.mxu0 0.0
  %307 = vmatmul.mubr.f32.gmra.mrb[0].mxu0 %v32
  %v308 = vpop.f32.mrb[0].mxu0
  %v309 = vadd.f32 %v95, %v308
  %v310 = vpop.f32.mrb[0].mxu0
  %311 = vmatprep.mubr.f32.mxu0 0.0
  %312 = vmatmul.mubr.f32.gmra.mrb[0].mxu0 %v33
  %v313 = vpop.f32.mrb[0].mxu0
  %v314 = vadd.f32 %v95, %v313
  %v315 = vpop.f32.mrb[0].mxu0
  %316 = vdwg.mxu0
  %317 = vst [vmem:[#allocation3] sm:$0xff] %v166
  %318 = vst [vmem:[#allocation3 + $0x8] sm:$0xff] %v168
  %319 = vst [vmem:[#allocation3 + $0x10] sm:$0xff] %v279
  %320 = vst [vmem:[#allocation3 + $0x18] sm:$0xff] %v172
  %321 = vst [vmem:[#allocation3 + $0x20] sm:$0xff] %v174
  %322 = vst [vmem:[#allocation3 + $0x28] sm:$0xff] %v284
  %323 = vst [vmem:[#allocation3 + $0x30] sm:$0xff] %v178
  %324 = vst [vmem:[#allocation3 + $0x38] sm:$0xff] %v180
  %325 = vst [vmem:[#allocation3 + $0x40] sm:$0xff] %v289
  %326 = vst [vmem:[#allocation3 + $0x48] sm:$0xff] %v184
  %327 = vst [vmem:[#allocation3 + $0x50] sm:$0xff] %v186
  %328 = vst [vmem:[#allocation3 + $0x58] sm:$0xff] %v294
  %329 = vst [vmem:[#allocation3 + $0x60] sm:$0xff] %v190
  %330 = vst [vmem:[#allocation3 + $0x68] sm:$0xff] %v192
  %331 = vst [vmem:[#allocation3 + $0x70] sm:$0xff] %v299
  %332 = vst [vmem:[#allocation3 + $0x78] sm:$0xff] %v196
  %333 = vst [vmem:[#allocation3 + $0x80] sm:$0xff] %v198
  %334 = vst [vmem:[#allocation3 + $0x88] sm:$0xff] %v304
  %335 = vst [vmem:[#allocation3 + $0x90] sm:$0xff] %v202
  %336 = vst [vmem:[#allocation3 + $0x98] sm:$0xff] %v204
  %337 = vst [vmem:[#allocation3 + $0xa0] sm:$0xff] %v309
  %338 = vst [vmem:[#allocation3 + $0xa8] sm:$0xff] %v208
  %339 = vst [vmem:[#allocation3 + $0xb0] sm:$0xff] %v210
  %340 = vst [vmem:[#allocation3 + $0xb8] sm:$0xff] %v314
  %v341 = vld [vmem:[#allocation2] sm:$0xff]
  %v342 = vld [vmem:[#allocation3] sm:$0xff]
  %v343 = vld [vmem:[#allocation3 + $0x8] sm:$0xff]
  %v344 = vld [vmem:[#allocation3 + $0x10] sm:$0xff]
  %v345 = vpack.c.bf16 %v341, %v341
  %v346 = vld [vmem:[%s3] sm:$0xff]
  %v347 = vld [vmem:[%s3 + $0x8] sm:$0xff]
  %v348 = vld [vmem:[%s3 + $0x10] sm:$0xff]
  %v349 = vld [vmem:[%s3 + $0x18] sm:$0xff]
  %v350 = vld [vmem:[%s3 + $0x20] sm:$0xff]
  %v351 = vld [vmem:[%s3 + $0x28] sm:$0xff]
  %v352 = vld [vmem:[%s3 + $0x30] sm:$0xff]
  %v353 = vld [vmem:[%s3 + $0x38] sm:$0xff]
  %v354 = vld [vmem:[%s3 + $0x40] sm:$0xff]
  %v355 = vld [vmem:[%s3 + $0x48] sm:$0xff]
  %v356 = vld [vmem:[%s3 + $0x50] sm:$0xff]
  %v357 = vld [vmem:[%s3 + $0x58] sm:$0xff]
  %v358 = vld [vmem:[%s3 + $0x60] sm:$0xff]
  %v359 = vld [vmem:[%s3 + $0x68] sm:$0xff]
  %v360 = vld [vmem:[%s3 + $0x70] sm:$0xff]
  %v361 = vld [vmem:[%s3 + $0x78] sm:$0xff]
  %v378 = vunpack.c.l.b16 %v346
  %v379 = vunpack.c.h.b16 %v346
  %v380 = vunpack.c.l.b16 %v347
  %v381 = vunpack.c.h.b16 %v347
  %v382 = vunpack.c.l.b16 %v348
  %v383 = vunpack.c.h.b16 %v348
  %v384 = vunpack.c.l.b16 %v349
  %v385 = vunpack.c.h.b16 %v349
  %v386 = vunpack.c.l.b16 %v350
  %v387 = vunpack.c.h.b16 %v350
  %v388 = vunpack.c.l.b16 %v351
  %v389 = vunpack.c.h.b16 %v351
  %v390 = vunpack.c.l.b16 %v352
  %v391 = vunpack.c.h.b16 %v352
  %v392 = vunpack.c.l.b16 %v353
  %v393 = vunpack.c.h.b16 %v353
  %v394 = vunpack.c.l.b16 %v354
  %v395 = vunpack.c.h.b16 %v354
  %v396 = vunpack.c.l.b16 %v355
  %v397 = vunpack.c.h.b16 %v355
  %v398 = vunpack.c.l.b16 %v356
  %v399 = vunpack.c.h.b16 %v356
  %v400 = vunpack.c.l.b16 %v357
  %v401 = vunpack.c.h.b16 %v357
  %v402 = vunpack.c.l.b16 %v358
  %v403 = vunpack.c.h.b16 %v358
  %v404 = vunpack.c.l.b16 %v359
  %v405 = vunpack.c.h.b16 %v359
  %v406 = vunpack.c.l.b16 %v360
  %v407 = vunpack.c.h.b16 %v360
  %v408 = vunpack.c.l.b16 %v361
  %v409 = vunpack.c.h.b16 %v361
  %v410 = vpack.c.b16 %v380, %v378
  %v411 = vpack.c.b16 %v381, %v379
  %v412 = vpack.c.b16 %v384, %v382
  %v413 = vpack.c.b16 %v385, %v383
  %v414 = vpack.c.b16 %v388, %v386
  %v415 = vpack.c.b16 %v389, %v387
  %v416 = vpack.c.b16 %v392, %v390
  %v417 = vpack.c.b16 %v393, %v391
  %v418 = vpack.c.b16 %v396, %v394
  %v419 = vpack.c.b16 %v397, %v395
  %v420 = vpack.c.b16 %v400, %v398
  %v421 = vpack.c.b16 %v401, %v399
  %v422 = vpack.c.b16 %v404, %v402
  %v423 = vpack.c.b16 %v405, %v403
  %v424 = vpack.c.b16 %v408, %v406
  %v425 = vpack.c.b16 %v409, %v407
  %442 = vmatprep.subr.bf16.mxu0 %v411
  %443 = vmatpush1.bf16.msra.mxu0 %v410
  %444 = vmatprep.subr.bf16.mxu0 %v413
  %445 = vmatpush1.bf16.msra.mxu0 %v412
  %446 = vmatprep.subr.bf16.mxu0 %v415
  %447 = vmatpush1.bf16.msra.mxu0 %v414
  %448 = vmatprep.subr.bf16.mxu0 %v417
  %449 = vmatpush1.bf16.msra.mxu0 %v416
  %450 = vmatprep.subr.bf16.mxu0 %v419
  %451 = vmatpush1.bf16.msra.mxu0 %v418
  %452 = vmatprep.subr.bf16.mxu0 %v421
  %453 = vmatpush1.bf16.msra.mxu0 %v420
  %454 = vmatprep.subr.bf16.mxu0 %v423
  %455 = vmatpush1.bf16.msra.mxu0 %v422
  %456 = vmatprep.subr.bf16.mxu0 %v425
  %457 = vmatpush1.bf16.msra.mxu0 %v424
  %458 = vmatprep.subr.bf16.mxu0 0
  %459 = vmatpush1.bf16.msra.mxu0 0
  %460 = vmatprep.subr.bf16.mxu0 0
  %461 = vmatpush1.bf16.msra.mxu0 0
  %462 = vmatprep.subr.bf16.mxu0 0
  %463 = vmatpush1.bf16.msra.mxu0 0
  %464 = vmatprep.subr.bf16.mxu0 0
  %465 = vmatpush1.bf16.msra.mxu0 0
  %466 = vmatprep.subr.bf16.mxu0 0
  %467 = vmatpush1.bf16.msra.mxu0 0
  %468 = vmatprep.subr.bf16.mxu0 0
  %469 = vmatpush1.bf16.msra.mxu0 0
  %470 = vmatprep.subr.bf16.mxu0 0
  %471 = vmatpush1.bf16.msra.mxu0 0
  %472 = vmatprep.subr.bf16.mxu0 0
  %473 = vmatpush1.bf16.msra.mxu0 0
  %474 = vmatprep.mubr.bf16.mxu0 0
  %475 = vmatmul.mubr.bf16.gmra.mrb[0].mxu0 %v345
  %v476 = vpop.f32.mrb[0].mxu0
  %v477 = vadd.f32 0.0, %v476
  %v478 = vpop.f32.mrb[0].mxu0
  %v479 = vadd.f32 0.0, %v478
  %v480 = vpop.f32.mrb[0].mxu0
  %v481 = vpop.f32.mrb[0].mxu0
  %482 = vdwg.mxu0
  %v483 = vadd.f32 %v342, %v477
  %v484 = vxor.u32 %v483, 2147483648
  %v485 = vmul.f32 %v484, 1.442695
  %v486 = vpow.pop %v485
  %v487 = vadd.f32 %v486, 1.0
  %v488 = vrcp.pop %v487
  %v489 = vmul.f32 1.0, %v488
  %v490 = vadd.f32 %v343, %v479
  %v491 = vxor.u32 %v490, 2147483648
  %v492 = vmul.f32 %v491, 1.442695
  %v493 = vpow.pop %v492
  %v494 = vadd.f32 %v493, 1.0
  %v495 = vrcp.pop %v494
  %v496 = vmul.f32 1.0, %v495
  %v497 = vmul.f32 %v341, %v496
  %v498 = vld [vmem:[%s4] sm:$0xff]
  %v499 = vld [vmem:[%s4 + $0x8] sm:$0xff]
  %v500 = vld [vmem:[%s4 + $0x10] sm:$0xff]
  %v501 = vld [vmem:[%s4 + $0x18] sm:$0xff]
  %v502 = vld [vmem:[%s4 + $0x20] sm:$0xff]
  %v503 = vld [vmem:[%s4 + $0x28] sm:$0xff]
  %v504 = vld [vmem:[%s4 + $0x30] sm:$0xff]
  %v505 = vld [vmem:[%s4 + $0x38] sm:$0xff]
  %v506 = vld [vmem:[%s4 + $0x40] sm:$0xff]
  %v507 = vld [vmem:[%s4 + $0x48] sm:$0xff]
  %v508 = vld [vmem:[%s4 + $0x50] sm:$0xff]
  %v509 = vld [vmem:[%s4 + $0x58] sm:$0xff]
  %v510 = vld [vmem:[%s4 + $0x60] sm:$0xff]
  %v511 = vld [vmem:[%s4 + $0x68] sm:$0xff]
  %v512 = vld [vmem:[%s4 + $0x70] sm:$0xff]
  %v513 = vld [vmem:[%s4 + $0x78] sm:$0xff]
  %514 = vmatprep.subr.mxu0 0.0
  %515 = vmatpush1.msra.mxu0 %v498
  %516 = vmatprep.subr.mxu0 0.0
  %517 = vmatpush1.msra.mxu0 %v499
  %518 = vmatprep.subr.mxu0 0.0
  %519 = vmatpush1.msra.mxu0 %v500
  %520 = vmatprep.subr.mxu0 0.0
  %521 = vmatpush1.msra.mxu0 %v501
  %522 = vmatprep.subr.mxu0 0.0
  %523 = vmatpush1.msra.mxu0 %v502
  %524 = vmatprep.subr.mxu0 0.0
  %525 = vmatpush1.msra.mxu0 %v503
  %526 = vmatprep.subr.mxu0 0.0
  %527 = vmatpush1.msra.mxu0 %v504
  %528 = vmatprep.subr.mxu0 0.0
  %529 = vmatpush1.msra.mxu0 %v505
  %530 = vmatprep.subr.mxu0 0.0
  %531 = vmatpush1.msra.mxu0 %v506
  %532 = vmatprep.subr.mxu0 0.0
  %533 = vmatpush1.msra.mxu0 %v507
  %534 = vmatprep.subr.mxu0 0.0
  %535 = vmatpush1.msra.mxu0 %v508
  %536 = vmatprep.subr.mxu0 0.0
  %537 = vmatpush1.msra.mxu0 %v509
  %538 = vmatprep.subr.mxu0 0.0
  %539 = vmatpush1.msra.mxu0 %v510
  %540 = vmatprep.subr.mxu0 0.0
  %541 = vmatpush1.msra.mxu0 %v511
  %542 = vmatprep.subr.mxu0 0.0
  %543 = vmatpush1.msra.mxu0 %v512
  %544 = vmatprep.subr.mxu0 0.0
  %545 = vmatpush1.msra.mxu0 %v513
  %546 = vmatprep.subr.mxu0 0.0
  %547 = vmatpush1.msra.mxu0 0.0
  %548 = vmatprep.subr.mxu0 0.0
  %549 = vmatpush1.msra.mxu0 0.0
  %550 = vmatprep.subr.mxu0 0.0
  %551 = vmatpush1.msra.mxu0 0.0
  %552 = vmatprep.subr.mxu0 0.0
  %553 = vmatpush1.msra.mxu0 0.0
  %554 = vmatprep.subr.mxu0 0.0
  %555 = vmatpush1.msra.mxu0 0.0
  %556 = vmatprep.subr.mxu0 0.0
  %557 = vmatpush1.msra.mxu0 0.0
  %558 = vmatprep.subr.mxu0 0.0
  %559 = vmatpush1.msra.mxu0 0.0
  %560 = vmatprep.subr.mxu0 0.0
  %561 = vmatpush1.msra.mxu0 0.0
  %562 = vmatprep.subr.mxu0 0.0
  %563 = vmatpush1.msra.mxu0 0.0
  %564 = vmatprep.subr.mxu0 0.0
  %565 = vmatpush1.msra.mxu0 0.0
  %566 = vmatprep.subr.mxu0 0.0
  %567 = vmatpush1.msra.mxu0 0.0
  %568 = vmatprep.subr.mxu0 0.0
  %569 = vmatpush1.msra.mxu0 0.0
  %570 = vmatprep.subr.mxu0 0.0
  %571 = vmatpush1.msra.mxu0 0.0
  %572 = vmatprep.subr.mxu0 0.0
  %573 = vmatpush1.msra.mxu0 0.0
  %574 = vmatprep.subr.mxu0 0.0
  %575 = vmatpush1.msra.mxu0 0.0
  %576 = vmatprep.subr.mxu0 0.0
  %577 = vmatpush1.msra.mxu0 0.0
  %578 = vmatprep.mubr.f32.mxu0 0.0
  %579 = vmatmul.mubr.f32.gmra.mrb[0].mxu0 %v497
  %v580 = vpop.f32.mrb[0].mxu0
  %v581 = vadd.f32 0.0, %v580
  %v582 = vpop.f32.mrb[0].mxu0
  %583 = vdwg.mxu0
  %v584 = vadd.f32 %v344, %v581
  %v585 = vtanh.pop %v584
  %v586 = vsub.f32 1.0, %v489
  %v587 = vmul.f32 %v341, %v586
  %v588 = vmul.f32 %v489, %v585
  %v589 = vadd.f32 %v587, %v588
  %590 = vst [vmem:[%s5] sm:$0xff] %v589
  %s591 = scalar_lea.vmem [#allocation3], 24
  %v592 = vld [vmem:[%s591] sm:$0xff]
  %v593 = vld [vmem:[%s591 + $0x8] sm:$0xff]
  %v594 = vld [vmem:[%s591 + $0x10] sm:$0xff]
  %v595 = vpack.c.bf16 %v589, %v589
  %v596 = vld [vmem:[%s3] sm:$0xff]
  %v597 = vld [vmem:[%s3 + $0x8] sm:$0xff]
  %v598 = vld [vmem:[%s3 + $0x10] sm:$0xff]
  %v599 = vld [vmem:[%s3 + $0x18] sm:$0xff]
  %v600 = vld [vmem:[%s3 + $0x20] sm:$0xff]
  %v601 = vld [vmem:[%s3 + $0x28] sm:$0xff]
  %v602 = vld [vmem:[%s3 + $0x30] sm:$0xff]
  %v603 = vld [vmem:[%s3 + $0x38] sm:$0xff]
  %v604 = vld [vmem:[%s3 + $0x40] sm:$0xff]
  %v605 = vld [vmem:[%s3 + $0x48] sm:$0xff]
  %v606 = vld [vmem:[%s3 + $0x50] sm:$0xff]
  %v607 = vld [vmem:[%s3 + $0x58] sm:$0xff]
  %v608 = vld [vmem:[%s3 + $0x60] sm:$0xff]
  %v609 = vld [vmem:[%s3 + $0x68] sm:$0xff]
  %v610 = vld [vmem:[%s3 + $0x70] sm:$0xff]
  %v611 = vld [vmem:[%s3 + $0x78] sm:$0xff]
  %v628 = vunpack.c.l.b16 %v596
  %v629 = vunpack.c.h.b16 %v596
  %v630 = vunpack.c.l.b16 %v597
  %v631 = vunpack.c.h.b16 %v597
  %v632 = vunpack.c.l.b16 %v598
  %v633 = vunpack.c.h.b16 %v598
  %v634 = vunpack.c.l.b16 %v599
  %v635 = vunpack.c.h.b16 %v599
  %v636 = vunpack.c.l.b16 %v600
  %v637 = vunpack.c.h.b16 %v600
  %v638 = vunpack.c.l.b16 %v601
  %v639 = vunpack.c.h.b16 %v601
  %v640 = vunpack.c.l.b16 %v602
  %v641 = vunpack.c.h.b16 %v602
  %v642 = vunpack.c.l.b16 %v603
  %v643 = vunpack.c.h.b16 %v603
  %v644 = vunpack.c.l.b16 %v604
  %v645 = vunpack.c.h.b16 %v604
  %v646 = vunpack.c.l.b16 %v605
  %v647 = vunpack.c.h.b16 %v605
  %v648 = vunpack.c.l.b16 %v606
  %v649 = vunpack.c.h.b16 %v606
  %v650 = vunpack.c.l.b16 %v607
  %v651 = vunpack.c.h.b16 %v607
  %v652 = vunpack.c.l.b16 %v608
  %v653 = vunpack.c.h.b16 %v608
  %v654 = vunpack.c.l.b16 %v609
  %v655 = vunpack.c.h.b16 %v609
  %v656 = vunpack.c.l.b16 %v610
  %v657 = vunpack.c.h.b16 %v610
  %v658 = vunpack.c.l.b16 %v611
  %v659 = vunpack.c.h.b16 %v611
  %v660 = vpack.c.b16 %v630, %v628
  %v661 = vpack.c.b16 %v631, %v629
  %v662 = vpack.c.b16 %v634, %v632
  %v663 = vpack.c.b16 %v635, %v633
  %v664 = vpack.c.b16 %v638, %v636
  %v665 = vpack.c.b16 %v639, %v637
  %v666 = vpack.c.b16 %v642, %v640
  %v667 = vpack.c.b16 %v643, %v641
  %v668 = vpack.c.b16 %v646, %v644
  %v669 = vpack.c.b16 %v647, %v645
  %v670 = vpack.c.b16 %v650, %v648
  %v671 = vpack.c.b16 %v651, %v649
  %v672 = vpack.c.b16 %v654, %v652
  %v673 = vpack.c.b16 %v655, %v653
  %v674 = vpack.c.b16 %v658, %v656
  %v675 = vpack.c.b16 %v659, %v657
  %692 = vmatprep.subr.bf16.mxu0 %v661
  %693 = vmatpush1.bf16.msra.mxu0 %v660
  %694 = vmatprep.subr.bf16.mxu0 %v663
  %695 = vmatpush1.bf16.msra.mxu0 %v662
  %696 = vmatprep.subr.bf16.mxu0 %v665
  %697 = vmatpush1.bf16.msra.mxu0 %v664
  %698 = vmatprep.subr.bf16.mxu0 %v667
  %699 = vmatpush1.bf16.msra.mxu0 %v666
  %700 = vmatprep.subr.bf16.mxu0 %v669
  %701 = vmatpush1.bf16.msra.mxu0 %v668
  %702 = vmatprep.subr.bf16.mxu0 %v671
  %703 = vmatpush1.bf16.msra.mxu0 %v670
  %704 = vmatprep.subr.bf16.mxu0 %v673
  %705 = vmatpush1.bf16.msra.mxu0 %v672
  %706 = vmatprep.subr.bf16.mxu0 %v675
  %707 = vmatpush1.bf16.msra.mxu0 %v674
  %708 = vmatprep.subr.bf16.mxu0 0
  %709 = vmatpush1.bf16.msra.mxu0 0
  %710 = vmatprep.subr.bf16.mxu0 0
  %711 = vmatpush1.bf16.msra.mxu0 0
  %712 = vmatprep.subr.bf16.mxu0 0
  %713 = vmatpush1.bf16.msra.mxu0 0
  %714 = vmatprep.subr.bf16.mxu0 0
  %715 = vmatpush1.bf16.msra.mxu0 0
  %716 = vmatprep.subr.bf16.mxu0 0
  %717 = vmatpush1.bf16.msra.mxu0 0
  %718 = vmatprep.subr.bf16.mxu0 0
  %719 = vmatpush1.bf16.msra.mxu0 0
  %720 = vmatprep.subr.bf16.mxu0 0
  %721 = vmatpush1.bf16.msra.mxu0 0
  %722 = vmatprep.subr.bf16.mxu0 0
  %723 = vmatpush1.bf16.msra.mxu0 0
  %724 = vmatprep.mubr.bf16.mxu0 0
  %725 = vmatmul.mubr.bf16.gmra.mrb[0].mxu0 %v595
  %v726 = vpop.f32.mrb[0].mxu0
  %v727 = vadd.f32 0.0, %v726
  %v728 = vpop.f32.mrb[0].mxu0
  %v729 = vadd.f32 0.0, %v728
  %v730 = vpop.f32.mrb[0].mxu0
  %v731 = vpop.f32.mrb[0].mxu0
  %732 = vdwg.mxu0
  %v733 = vadd.f32 %v592, %v727
  %v734 = vxor.u32 %v733, 2147483648
  %v735 = vmul.f32 %v734, 1.442695
  %v736 = vpow.pop %v735
  %v737 = vadd.f32 %v736, 1.0
  %v738 = vrcp.pop %v737
  %v739 = vmul.f32 1.0, %v738
  %v740 = vadd.f32 %v593, %v729
  %v741 = vxor.u32 %v740, 2147483648
  %v742 = vmul.f32 %v741, 1.442695
  %v743 = vpow.pop %v742
  %v744 = vadd.f32 %v743, 1.0
  %v745 = vrcp.pop %v744
  %v746 = vmul.f32 1.0, %v745
  %v747 = vmul.f32 %v589, %v746
  %v748 = vld [vmem:[%s4] sm:$0xff]
  %v749 = vld [vmem:[%s4 + $0x8] sm:$0xff]
  %v750 = vld [vmem:[%s4 + $0x10] sm:$0xff]
  %v751 = vld [vmem:[%s4 + $0x18] sm:$0xff]
  %v752 = vld [vmem:[%s4 + $0x20] sm:$0xff]
  %v753 = vld [vmem:[%s4 + $0x28] sm:$0xff]
  %v754 = vld [vmem:[%s4 + $0x30] sm:$0xff]
  %v755 = vld [vmem:[%s4 + $0x38] sm:$0xff]
  %v756 = vld [vmem:[%s4 + $0x40] sm:$0xff]
  %v757 = vld [vmem:[%s4 + $0x48] sm:$0xff]
  %v758 = vld [vmem:[%s4 + $0x50] sm:$0xff]
  %v759 = vld [vmem:[%s4 + $0x58] sm:$0xff]
  %v760 = vld [vmem:[%s4 + $0x60] sm:$0xff]
  %v761 = vld [vmem:[%s4 + $0x68] sm:$0xff]
  %v762 = vld [vmem:[%s4 + $0x70] sm:$0xff]
  %v763 = vld [vmem:[%s4 + $0x78] sm:$0xff]
  %764 = vmatprep.subr.mxu0 0.0
  %765 = vmatpush1.msra.mxu0 %v748
  %766 = vmatprep.subr.mxu0 0.0
  %767 = vmatpush1.msra.mxu0 %v749
  %768 = vmatprep.subr.mxu0 0.0
  %769 = vmatpush1.msra.mxu0 %v750
  %770 = vmatprep.subr.mxu0 0.0
  %771 = vmatpush1.msra.mxu0 %v751
  %772 = vmatprep.subr.mxu0 0.0
  %773 = vmatpush1.msra.mxu0 %v752
  %774 = vmatprep.subr.mxu0 0.0
  %775 = vmatpush1.msra.mxu0 %v753
  %776 = vmatprep.subr.mxu0 0.0
  %777 = vmatpush1.msra.mxu0 %v754
  %778 = vmatprep.subr.mxu0 0.0
  %779 = vmatpush1.msra.mxu0 %v755
  %780 = vmatprep.subr.mxu0 0.0
  %781 = vmatpush1.msra.mxu0 %v756
  %782 = vmatprep.subr.mxu0 0.0
  %783 = vmatpush1.msra.mxu0 %v757
  %784 = vmatprep.subr.mxu0 0.0
  %785 = vmatpush1.msra.mxu0 %v758
  %786 = vmatprep.subr.mxu0 0.0
  %787 = vmatpush1.msra.mxu0 %v759
  %788 = vmatprep.subr.mxu0 0.0
  %789 = vmatpush1.msra.mxu0 %v760
  %790 = vmatprep.subr.mxu0 0.0
  %791 = vmatpush1.msra.mxu0 %v761
  %792 = vmatprep.subr.mxu0 0.0
  %793 = vmatpush1.msra.mxu0 %v762
  %794 = vmatprep.subr.mxu0 0.0
  %795 = vmatpush1.msra.mxu0 %v763
  %796 = vmatprep.subr.mxu0 0.0
  %797 = vmatpush1.msra.mxu0 0.0
  %798 = vmatprep.subr.mxu0 0.0
  %799 = vmatpush1.msra.mxu0 0.0
  %800 = vmatprep.subr.mxu0 0.0
  %801 = vmatpush1.msra.mxu0 0.0
  %802 = vmatprep.subr.mxu0 0.0
  %803 = vmatpush1.msra.mxu0 0.0
  %804 = vmatprep.subr.mxu0 0.0
  %805 = vmatpush1.msra.mxu0 0.0
  %806 = vmatprep.subr.mxu0 0.0
  %807 = vmatpush1.msra.mxu0 0.0
  %808 = vmatprep.subr.mxu0 0.0
  %809 = vmatpush1.msra.mxu0 0.0
  %810 = vmatprep.subr.mxu0 0.0
  %811 = vmatpush1.msra.mxu0 0.0
  %812 = vmatprep.subr.mxu0 0.0
  %813 = vmatpush1.msra.mxu0 0.0
  %814 = vmatprep.subr.mxu0 0.0
  %815 = vmatpush1.msra.mxu0 0.0
  %816 = vmatprep.subr.mxu0 0.0
  %817 = vmatpush1.msra.mxu0 0.0
  %818 = vmatprep.subr.mxu0 0.0
  %819 = vmatpush1.msra.mxu0 0.0
  %820 = vmatprep.subr.mxu0 0.0
  %821 = vmatpush1.msra.mxu0 0.0
  %822 = vmatprep.subr.mxu0 0.0
  %823 = vmatpush1.msra.mxu0 0.0
  %824 = vmatprep.subr.mxu0 0.0
  %825 = vmatpush1.msra.mxu0 0.0
  %826 = vmatprep.subr.mxu0 0.0
  %827 = vmatpush1.msra.mxu0 0.0
  %828 = vmatprep.mubr.f32.mxu0 0.0
  %829 = vmatmul.mubr.f32.gmra.mrb[0].mxu0 %v747
  %v830 = vpop.f32.mrb[0].mxu0
  %v831 = vadd.f32 0.0, %v830
  %v832 = vpop.f32.mrb[0].mxu0
  %833 = vdwg.mxu0
  %v834 = vadd.f32 %v594, %v831
  %v835 = vtanh.pop %v834
  %v836 = vsub.f32 1.0, %v739
  %v837 = vmul.f32 %v589, %v836
  %v838 = vmul.f32 %v739, %v835
  %v839 = vadd.f32 %v837, %v838
  %s840 = scalar_lea.vmem %s5, 8
  %841 = vst [vmem:[%s840] sm:$0xff] %v839
  %s842 = scalar_lea.vmem [#allocation3], 48
  %v843 = vld [vmem:[%s842] sm:$0xff]
  %v844 = vld [vmem:[%s842 + $0x8] sm:$0xff]
  %v845 = vld [vmem:[%s842 + $0x10] sm:$0xff]
  %v846 = vpack.c.bf16 %v839, %v839
  %v847 = vld [vmem:[%s3] sm:$0xff]
  %v848 = vld [vmem:[%s3 + $0x8] sm:$0xff]
  %v849 = vld [vmem:[%s3 + $0x10] sm:$0xff]
  %v850 = vld [vmem:[%s3 + $0x18] sm:$0xff]
  %v851 = vld [vmem:[%s3 + $0x20] sm:$0xff]
  %v852 = vld [vmem:[%s3 + $0x28] sm:$0xff]
  %v853 = vld [vmem:[%s3 + $0x30] sm:$0xff]
  %v854 = vld [vmem:[%s3 + $0x38] sm:$0xff]
  %v855 = vld [vmem:[%s3 + $0x40] sm:$0xff]
  %v856 = vld [vmem:[%s3 + $0x48] sm:$0xff]
  %v857 = vld [vmem:[%s3 + $0x50] sm:$0xff]
  %v858 = vld [vmem:[%s3 + $0x58] sm:$0xff]
  %v859 = vld [vmem:[%s3 + $0x60] sm:$0xff]
  %v860 = vld [vmem:[%s3 + $0x68] sm:$0xff]
  %v861 = vld [vmem:[%s3 + $0x70] sm:$0xff]
  %v862 = vld [vmem:[%s3 + $0x78] sm:$0xff]
  %v879 = vunpack.c.l.b16 %v847
  %v880 = vunpack.c.h.b16 %v847
  %v881 = vunpack.c.l.b16 %v848
  %v882 = vunpack.c.h.b16 %v848
  %v883 = vunpack.c.l.b16 %v849
  %v884 = vunpack.c.h.b16 %v849
  %v885 = vunpack.c.l.b16 %v850
  %v886 = vunpack.c.h.b16 %v850
  %v887 = vunpack.c.l.b16 %v851
  %v888 = vunpack.c.h.b16 %v851
  %v889 = vunpack.c.l.b16 %v852
  %v890 = vunpack.c.h.b16 %v852
  %v891 = vunpack.c.l.b16 %v853
  %v892 = vunpack.c.h.b16 %v853
  %v893 = vunpack.c.l.b16 %v854
  %v894 = vunpack.c.h.b16 %v854
  %v895 = vunpack.c.l.b16 %v855
  %v896 = vunpack.c.h.b16 %v855
  %v897 = vunpack.c.l.b16 %v856
  %v898 = vunpack.c.h.b16 %v856
  %v899 = vunpack.c.l.b16 %v857
  %v900 = vunpack.c.h.b16 %v857
  %v901 = vunpack.c.l.b16 %v858
  %v902 = vunpack.c.h.b16 %v858
  %v903 = vunpack.c.l.b16 %v859
  %v904 = vunpack.c.h.b16 %v859
  %v905 = vunpack.c.l.b16 %v860
  %v906 = vunpack.c.h.b16 %v860
  %v907 = vunpack.c.l.b16 %v861
  %v908 = vunpack.c.h.b16 %v861
  %v909 = vunpack.c.l.b16 %v862
  %v910 = vunpack.c.h.b16 %v862
  %v911 = vpack.c.b16 %v881, %v879
  %v912 = vpack.c.b16 %v882, %v880
  %v913 = vpack.c.b16 %v885, %v883
  %v914 = vpack.c.b16 %v886, %v884
  %v915 = vpack.c.b16 %v889, %v887
  %v916 = vpack.c.b16 %v890, %v888
  %v917 = vpack.c.b16 %v893, %v891
  %v918 = vpack.c.b16 %v894, %v892
  %v919 = vpack.c.b16 %v897, %v895
  %v920 = vpack.c.b16 %v898, %v896
  %v921 = vpack.c.b16 %v901, %v899
  %v922 = vpack.c.b16 %v902, %v900
  %v923 = vpack.c.b16 %v905, %v903
  %v924 = vpack.c.b16 %v906, %v904
  %v925 = vpack.c.b16 %v909, %v907
  %v926 = vpack.c.b16 %v910, %v908
  %943 = vmatprep.subr.bf16.mxu0 %v912
  %944 = vmatpush1.bf16.msra.mxu0 %v911
  %945 = vmatprep.subr.bf16.mxu0 %v914
  %946 = vmatpush1.bf16.msra.mxu0 %v913
  %947 = vmatprep.subr.bf16.mxu0 %v916
  %948 = vmatpush1.bf16.msra.mxu0 %v915
  %949 = vmatprep.subr.bf16.mxu0 %v918
  %950 = vmatpush1.bf16.msra.mxu0 %v917
  %951 = vmatprep.subr.bf16.mxu0 %v920
  %952 = vmatpush1.bf16.msra.mxu0 %v919
  %953 = vmatprep.subr.bf16.mxu0 %v922
  %954 = vmatpush1.bf16.msra.mxu0 %v921
  %955 = vmatprep.subr.bf16.mxu0 %v924
  %956 = vmatpush1.bf16.msra.mxu0 %v923
  %957 = vmatprep.subr.bf16.mxu0 %v926
  %958 = vmatpush1.bf16.msra.mxu0 %v925
  %959 = vmatprep.subr.bf16.mxu0 0
  %960 = vmatpush1.bf16.msra.mxu0 0
  %961 = vmatprep.subr.bf16.mxu0 0
  %962 = vmatpush1.bf16.msra.mxu0 0
  %963 = vmatprep.subr.bf16.mxu0 0
  %964 = vmatpush1.bf16.msra.mxu0 0
  %965 = vmatprep.subr.bf16.mxu0 0
  %966 = vmatpush1.bf16.msra.mxu0 0
  %967 = vmatprep.subr.bf16.mxu0 0
  %968 = vmatpush1.bf16.msra.mxu0 0
  %969 = vmatprep.subr.bf16.mxu0 0
  %970 = vmatpush1.bf16.msra.mxu0 0
  %971 = vmatprep.subr.bf16.mxu0 0
  %972 = vmatpush1.bf16.msra.mxu0 0
  %973 = vmatprep.subr.bf16.mxu0 0
  %974 = vmatpush1.bf16.msra.mxu0 0
  %975 = vmatprep.mubr.bf16.mxu0 0
  %976 = vmatmul.mubr.bf16.gmra.mrb[0].mxu0 %v846
  %v977 = vpop.f32.mrb[0].mxu0
  %v978 = vadd.f32 0.0, %v977
  %v979 = vpop.f32.mrb[0].mxu0
  %v980 = vadd.f32 0.0, %v979
  %v981 = vpop.f32.mrb[0].mxu0
  %v982 = vpop.f32.mrb[0].mxu0
  %983 = vdwg.mxu0
  %v984 = vadd.f32 %v843, %v978
  %v985 = vxor.u32 %v984, 2147483648
  %v986 = vmul.f32 %v985, 1.442695
  %v987 = vpow.pop %v986
  %v988 = vadd.f32 %v987, 1.0
  %v989 = vrcp.pop %v988
  %v990 = vmul.f32 1.0, %v989
  %v991 = vadd.f32 %v844, %v980
  %v992 = vxor.u32 %v991, 2147483648
  %v993 = vmul.f32 %v992, 1.442695
  %v994 = vpow.pop %v993
  %v995 = vadd.f32 %v994, 1.0
  %v996 = vrcp.pop %v995
  %v997 = vmul.f32 1.0, %v996
  %v998 = vmul.f32 %v839, %v997
  %v999 = vld [vmem:[%s4] sm:$0xff]
  %v1000 = vld [vmem:[%s4 + $0x8] sm:$0xff]
  %v1001 = vld [vmem:[%s4 + $0x10] sm:$0xff]
  %v1002 = vld [vmem:[%s4 + $0x18] sm:$0xff]
  %v1003 = vld [vmem:[%s4 + $0x20] sm:$0xff]
  %v1004 = vld [vmem:[%s4 + $0x28] sm:$0xff]
  %v1005 = vld [vmem:[%s4 + $0x30] sm:$0xff]
  %v1006 = vld [vmem:[%s4 + $0x38] sm:$0xff]
  %v1007 = vld [vmem:[%s4 + $0x40] sm:$0xff]
  %v1008 = vld [vmem:[%s4 + $0x48] sm:$0xff]
  %v1009 = vld [vmem:[%s4 + $0x50] sm:$0xff]
  %v1010 = vld [vmem:[%s4 + $0x58] sm:$0xff]
  %v1011 = vld [vmem:[%s4 + $0x60] sm:$0xff]
  %v1012 = vld [vmem:[%s4 + $0x68] sm:$0xff]
  %v1013 = vld [vmem:[%s4 + $0x70] sm:$0xff]
  %v1014 = vld [vmem:[%s4 + $0x78] sm:$0xff]
  %1015 = vmatprep.subr.mxu0 0.0
  %1016 = vmatpush1.msra.mxu0 %v999
  %1017 = vmatprep.subr.mxu0 0.0
  %1018 = vmatpush1.msra.mxu0 %v1000
  %1019 = vmatprep.subr.mxu0 0.0
  %1020 = vmatpush1.msra.mxu0 %v1001
  %1021 = vmatprep.subr.mxu0 0.0
  %1022 = vmatpush1.msra.mxu0 %v1002
  %1023 = vmatprep.subr.mxu0 0.0
  %1024 = vmatpush1.msra.mxu0 %v1003
  %1025 = vmatprep.subr.mxu0 0.0
  %1026 = vmatpush1.msra.mxu0 %v1004
  %1027 = vmatprep.subr.mxu0 0.0
  %1028 = vmatpush1.msra.mxu0 %v1005
  %1029 = vmatprep.subr.mxu0 0.0
  %1030 = vmatpush1.msra.mxu0 %v1006
  %1031 = vmatprep.subr.mxu0 0.0
  %1032 = vmatpush1.msra.mxu0 %v1007
  %1033 = vmatprep.subr.mxu0 0.0
  %1034 = vmatpush1.msra.mxu0 %v1008
  %1035 = vmatprep.subr.mxu0 0.0
  %1036 = vmatpush1.msra.mxu0 %v1009
  %1037 = vmatprep.subr.mxu0 0.0
  %1038 = vmatpush1.msra.mxu0 %v1010
  %1039 = vmatprep.subr.mxu0 0.0
  %1040 = vmatpush1.msra.mxu0 %v1011
  %1041 = vmatprep.subr.mxu0 0.0
  %1042 = vmatpush1.msra.mxu0 %v1012
  %1043 = vmatprep.subr.mxu0 0.0
  %1044 = vmatpush1.msra.mxu0 %v1013
  %1045 = vmatprep.subr.mxu0 0.0
  %1046 = vmatpush1.msra.mxu0 %v1014
  %1047 = vmatprep.subr.mxu0 0.0
  %1048 = vmatpush1.msra.mxu0 0.0
  %1049 = vmatprep.subr.mxu0 0.0
  %1050 = vmatpush1.msra.mxu0 0.0
  %1051 = vmatprep.subr.mxu0 0.0
  %1052 = vmatpush1.msra.mxu0 0.0
  %1053 = vmatprep.subr.mxu0 0.0
  %1054 = vmatpush1.msra.mxu0 0.0
  %1055 = vmatprep.subr.mxu0 0.0
  %1056 = vmatpush1.msra.mxu0 0.0
  %1057 = vmatprep.subr.mxu0 0.0
  %1058 = vmatpush1.msra.mxu0 0.0
  %1059 = vmatprep.subr.mxu0 0.0
  %1060 = vmatpush1.msra.mxu0 0.0
  %1061 = vmatprep.subr.mxu0 0.0
  %1062 = vmatpush1.msra.mxu0 0.0
  %1063 = vmatprep.subr.mxu0 0.0
  %1064 = vmatpush1.msra.mxu0 0.0
  %1065 = vmatprep.subr.mxu0 0.0
  %1066 = vmatpush1.msra.mxu0 0.0
  %1067 = vmatprep.subr.mxu0 0.0
  %1068 = vmatpush1.msra.mxu0 0.0
  %1069 = vmatprep.subr.mxu0 0.0
  %1070 = vmatpush1.msra.mxu0 0.0
  %1071 = vmatprep.subr.mxu0 0.0
  %1072 = vmatpush1.msra.mxu0 0.0
  %1073 = vmatprep.subr.mxu0 0.0
  %1074 = vmatpush1.msra.mxu0 0.0
  %1075 = vmatprep.subr.mxu0 0.0
  %1076 = vmatpush1.msra.mxu0 0.0
  %1077 = vmatprep.subr.mxu0 0.0
  %1078 = vmatpush1.msra.mxu0 0.0
  %1079 = vmatprep.mubr.f32.mxu0 0.0
  %1080 = vmatmul.mubr.f32.gmra.mrb[0].mxu0 %v998
  %v1081 = vpop.f32.mrb[0].mxu0
  %v1082 = vadd.f32 0.0, %v1081
  %v1083 = vpop.f32.mrb[0].mxu0
  %1084 = vdwg.mxu0
  %v1085 = vadd.f32 %v845, %v1082
  %v1086 = vtanh.pop %v1085
  %v1087 = vsub.f32 1.0, %v990
  %v1088 = vmul.f32 %v839, %v1087
  %v1089 = vmul.f32 %v990, %v1086
  %v1090 = vadd.f32 %v1088, %v1089
  %s1091 = scalar_lea.vmem %s5, 16
  %1092 = vst [vmem:[%s1091] sm:$0xff] %v1090
  %s1093 = scalar_lea.vmem [#allocation3], 72
  %v1094 = vld [vmem:[%s1093] sm:$0xff]
  %v1095 = vld [vmem:[%s1093 + $0x8] sm:$0xff]
  %v1096 = vld [vmem:[%s1093 + $0x10] sm:$0xff]
  %v1097 = vpack.c.bf16 %v1090, %v1090
  %v1098 = vld [vmem:[%s3] sm:$0xff]
  %v1099 = vld [vmem:[%s3 + $0x8] sm:$0xff]
  %v1100 = vld [vmem:[%s3 + $0x10] sm:$0xff]
  %v1101 = vld [vmem:[%s3 + $0x18] sm:$0xff]
  %v1102 = vld [vmem:[%s3 + $0x20] sm:$0xff]
  %v1103 = vld [vmem:[%s3 + $0x28] sm:$0xff]
  %v1104 = vld [vmem:[%s3 + $0x30] sm:$0xff]
  %v1105 = vld [vmem:[%s3 + $0x38] sm:$0xff]
  %v1106 = vld [vmem:[%s3 + $0x40] sm:$0xff]
  %v1107 = vld [vmem:[%s3 + $0x48] sm:$0xff]
  %v1108 = vld [vmem:[%s3 + $0x50] sm:$0xff]
  %v1109 = vld [vmem:[%s3 + $0x58] sm:$0xff]
  %v1110 = vld [vmem:[%s3 + $0x60] sm:$0xff]
  %v1111 = vld [vmem:[%s3 + $0x68] sm:$0xff]
  %v1112 = vld [vmem:[%s3 + $0x70] sm:$0xff]
  %v1113 = vld [vmem:[%s3 + $0x78] sm:$0xff]
  %v1130 = vunpack.c.l.b16 %v1098
  %v1131 = vunpack.c.h.b16 %v1098
  %v1132 = vunpack.c.l.b16 %v1099
  %v1133 = vunpack.c.h.b16 %v1099
  %v1134 = vunpack.c.l.b16 %v1100
  %v1135 = vunpack.c.h.b16 %v1100
  %v1136 = vunpack.c.l.b16 %v1101
  %v1137 = vunpack.c.h.b16 %v1101
  %v1138 = vunpack.c.l.b16 %v1102
  %v1139 = vunpack.c.h.b16 %v1102
  %v1140 = vunpack.c.l.b16 %v1103
  %v1141 = vunpack.c.h.b16 %v1103
  %v1142 = vunpack.c.l.b16 %v1104
  %v1143 = vunpack.c.h.b16 %v1104
  %v1144 = vunpack.c.l.b16 %v1105
  %v1145 = vunpack.c.h.b16 %v1105
  %v1146 = vunpack.c.l.b16 %v1106
  %v1147 = vunpack.c.h.b16 %v1106
  %v1148 = vunpack.c.l.b16 %v1107
  %v1149 = vunpack.c.h.b16 %v1107
  %v1150 = vunpack.c.l.b16 %v1108
  %v1151 = vunpack.c.h.b16 %v1108
  %v1152 = vunpack.c.l.b16 %v1109
  %v1153 = vunpack.c.h.b16 %v1109
  %v1154 = vunpack.c.l.b16 %v1110
  %v1155 = vunpack.c.h.b16 %v1110
  %v1156 = vunpack.c.l.b16 %v1111
  %v1157 = vunpack.c.h.b16 %v1111
  %v1158 = vunpack.c.l.b16 %v1112
  %v1159 = vunpack.c.h.b16 %v1112
  %v1160 = vunpack.c.l.b16 %v1113
  %v1161 = vunpack.c.h.b16 %v1113
  %v1162 = vpack.c.b16 %v1132, %v1130
  %v1163 = vpack.c.b16 %v1133, %v1131
  %v1164 = vpack.c.b16 %v1136, %v1134
  %v1165 = vpack.c.b16 %v1137, %v1135
  %v1166 = vpack.c.b16 %v1140, %v1138
  %v1167 = vpack.c.b16 %v1141, %v1139
  %v1168 = vpack.c.b16 %v1144, %v1142
  %v1169 = vpack.c.b16 %v1145, %v1143
  %v1170 = vpack.c.b16 %v1148, %v1146
  %v1171 = vpack.c.b16 %v1149, %v1147
  %v1172 = vpack.c.b16 %v1152, %v1150
  %v1173 = vpack.c.b16 %v1153, %v1151
  %v1174 = vpack.c.b16 %v1156, %v1154
  %v1175 = vpack.c.b16 %v1157, %v1155
  %v1176 = vpack.c.b16 %v1160, %v1158
  %v1177 = vpack.c.b16 %v1161, %v1159
  %1194 = vmatprep.subr.bf16.mxu0 %v1163
  %1195 = vmatpush1.bf16.msra.mxu0 %v1162
  %1196 = vmatprep.subr.bf16.mxu0 %v1165
  %1197 = vmatpush1.bf16.msra.mxu0 %v1164
  %1198 = vmatprep.subr.bf16.mxu0 %v1167
  %1199 = vmatpush1.bf16.msra.mxu0 %v1166
  %1200 = vmatprep.subr.bf16.mxu0 %v1169
  %1201 = vmatpush1.bf16.msra.mxu0 %v1168
  %1202 = vmatprep.subr.bf16.mxu0 %v1171
  %1203 = vmatpush1.bf16.msra.mxu0 %v1170
  %1204 = vmatprep.subr.bf16.mxu0 %v1173
  %1205 = vmatpush1.bf16.msra.mxu0 %v1172
  %1206 = vmatprep.subr.bf16.mxu0 %v1175
  %1207 = vmatpush1.bf16.msra.mxu0 %v1174
  %1208 = vmatprep.subr.bf16.mxu0 %v1177
  %1209 = vmatpush1.bf16.msra.mxu0 %v1176
  %1210 = vmatprep.subr.bf16.mxu0 0
  %1211 = vmatpush1.bf16.msra.mxu0 0
  %1212 = vmatprep.subr.bf16.mxu0 0
  %1213 = vmatpush1.bf16.msra.mxu0 0
  %1214 = vmatprep.subr.bf16.mxu0 0
  %1215 = vmatpush1.bf16.msra.mxu0 0
  %1216 = vmatprep.subr.bf16.mxu0 0
  %1217 = vmatpush1.bf16.msra.mxu0 0
  %1218 = vmatprep.subr.bf16.mxu0 0
  %1219 = vmatpush1.bf16.msra.mxu0 0
  %1220 = vmatprep.subr.bf16.mxu0 0
  %1221 = vmatpush1.bf16.msra.mxu0 0
  %1222 = vmatprep.subr.bf16.mxu0 0
  %1223 = vmatpush1.bf16.msra.mxu0 0
  %1224 = vmatprep.subr.bf16.mxu0 0
  %1225 = vmatpush1.bf16.msra.mxu0 0
  %1226 = vmatprep.mubr.bf16.mxu0 0
  %1227 = vmatmul.mubr.bf16.gmra.mrb[0].mxu0 %v1097
  %v1228 = vpop.f32.mrb[0].mxu0
  %v1229 = vadd.f32 0.0, %v1228
  %v1230 = vpop.f32.mrb[0].mxu0
  %v1231 = vadd.f32 0.0, %v1230
  %v1232 = vpop.f32.mrb[0].mxu0
  %v1233 = vpop.f32.mrb[0].mxu0
  %1234 = vdwg.mxu0
  %v1235 = vadd.f32 %v1094, %v1229
  %v1236 = vxor.u32 %v1235, 2147483648
  %v1237 = vmul.f32 %v1236, 1.442695
  %v1238 = vpow.pop %v1237
  %v1239 = vadd.f32 %v1238, 1.0
  %v1240 = vrcp.pop %v1239
  %v1241 = vmul.f32 1.0, %v1240
  %v1242 = vadd.f32 %v1095, %v1231
  %v1243 = vxor.u32 %v1242, 2147483648
  %v1244 = vmul.f32 %v1243, 1.442695
  %v1245 = vpow.pop %v1244
  %v1246 = vadd.f32 %v1245, 1.0
  %v1247 = vrcp.pop %v1246
  %v1248 = vmul.f32 1.0, %v1247
  %v1249 = vmul.f32 %v1090, %v1248
  %v1250 = vld [vmem:[%s4] sm:$0xff]
  %v1251 = vld [vmem:[%s4 + $0x8] sm:$0xff]
  %v1252 = vld [vmem:[%s4 + $0x10] sm:$0xff]
  %v1253 = vld [vmem:[%s4 + $0x18] sm:$0xff]
  %v1254 = vld [vmem:[%s4 + $0x20] sm:$0xff]
  %v1255 = vld [vmem:[%s4 + $0x28] sm:$0xff]
  %v1256 = vld [vmem:[%s4 + $0x30] sm:$0xff]
  %v1257 = vld [vmem:[%s4 + $0x38] sm:$0xff]
  %v1258 = vld [vmem:[%s4 + $0x40] sm:$0xff]
  %v1259 = vld [vmem:[%s4 + $0x48] sm:$0xff]
  %v1260 = vld [vmem:[%s4 + $0x50] sm:$0xff]
  %v1261 = vld [vmem:[%s4 + $0x58] sm:$0xff]
  %v1262 = vld [vmem:[%s4 + $0x60] sm:$0xff]
  %v1263 = vld [vmem:[%s4 + $0x68] sm:$0xff]
  %v1264 = vld [vmem:[%s4 + $0x70] sm:$0xff]
  %v1265 = vld [vmem:[%s4 + $0x78] sm:$0xff]
  %1266 = vmatprep.subr.mxu0 0.0
  %1267 = vmatpush1.msra.mxu0 %v1250
  %1268 = vmatprep.subr.mxu0 0.0
  %1269 = vmatpush1.msra.mxu0 %v1251
  %1270 = vmatprep.subr.mxu0 0.0
  %1271 = vmatpush1.msra.mxu0 %v1252
  %1272 = vmatprep.subr.mxu0 0.0
  %1273 = vmatpush1.msra.mxu0 %v1253
  %1274 = vmatprep.subr.mxu0 0.0
  %1275 = vmatpush1.msra.mxu0 %v1254
  %1276 = vmatprep.subr.mxu0 0.0
  %1277 = vmatpush1.msra.mxu0 %v1255
  %1278 = vmatprep.subr.mxu0 0.0
  %1279 = vmatpush1.msra.mxu0 %v1256
  %1280 = vmatprep.subr.mxu0 0.0
  %1281 = vmatpush1.msra.mxu0 %v1257
  %1282 = vmatprep.subr.mxu0 0.0
  %1283 = vmatpush1.msra.mxu0 %v1258
  %1284 = vmatprep.subr.mxu0 0.0
  %1285 = vmatpush1.msra.mxu0 %v1259
  %1286 = vmatprep.subr.mxu0 0.0
  %1287 = vmatpush1.msra.mxu0 %v1260
  %1288 = vmatprep.subr.mxu0 0.0
  %1289 = vmatpush1.msra.mxu0 %v1261
  %1290 = vmatprep.subr.mxu0 0.0
  %1291 = vmatpush1.msra.mxu0 %v1262
  %1292 = vmatprep.subr.mxu0 0.0
  %1293 = vmatpush1.msra.mxu0 %v1263
  %1294 = vmatprep.subr.mxu0 0.0
  %1295 = vmatpush1.msra.mxu0 %v1264
  %1296 = vmatprep.subr.mxu0 0.0
  %1297 = vmatpush1.msra.mxu0 %v1265
  %1298 = vmatprep.subr.mxu0 0.0
  %1299 = vmatpush1.msra.mxu0 0.0
  %1300 = vmatprep.subr.mxu0 0.0
  %1301 = vmatpush1.msra.mxu0 0.0
  %1302 = vmatprep.subr.mxu0 0.0
  %1303 = vmatpush1.msra.mxu0 0.0
  %1304 = vmatprep.subr.mxu0 0.0
  %1305 = vmatpush1.msra.mxu0 0.0
  %1306 = vmatprep.subr.mxu0 0.0
  %1307 = vmatpush1.msra.mxu0 0.0
  %1308 = vmatprep.subr.mxu0 0.0
  %1309 = vmatpush1.msra.mxu0 0.0
  %1310 = vmatprep.subr.mxu0 0.0
  %1311 = vmatpush1.msra.mxu0 0.0
  %1312 = vmatprep.subr.mxu0 0.0
  %1313 = vmatpush1.msra.mxu0 0.0
  %1314 = vmatprep.subr.mxu0 0.0
  %1315 = vmatpush1.msra.mxu0 0.0
  %1316 = vmatprep.subr.mxu0 0.0
  %1317 = vmatpush1.msra.mxu0 0.0
  %1318 = vmatprep.subr.mxu0 0.0
  %1319 = vmatpush1.msra.mxu0 0.0
  %1320 = vmatprep.subr.mxu0 0.0
  %1321 = vmatpush1.msra.mxu0 0.0
  %1322 = vmatprep.subr.mxu0 0.0
  %1323 = vmatpush1.msra.mxu0 0.0
  %1324 = vmatprep.subr.mxu0 0.0
  %1325 = vmatpush1.msra.mxu0 0.0
  %1326 = vmatprep.subr.mxu0 0.0
  %1327 = vmatpush1.msra.mxu0 0.0
  %1328 = vmatprep.subr.mxu0 0.0
  %1329 = vmatpush1.msra.mxu0 0.0
  %1330 = vmatprep.mubr.f32.mxu0 0.0
  %1331 = vmatmul.mubr.f32.gmra.mrb[0].mxu0 %v1249
  %v1332 = vpop.f32.mrb[0].mxu0
  %v1333 = vadd.f32 0.0, %v1332
  %v1334 = vpop.f32.mrb[0].mxu0
  %1335 = vdwg.mxu0
  %v1336 = vadd.f32 %v1096, %v1333
  %v1337 = vtanh.pop %v1336
  %v1338 = vsub.f32 1.0, %v1241
  %v1339 = vmul.f32 %v1090, %v1338
  %v1340 = vmul.f32 %v1241, %v1337
  %v1341 = vadd.f32 %v1339, %v1340
  %s1342 = scalar_lea.vmem %s5, 24
  %1343 = vst [vmem:[%s1342] sm:$0xff] %v1341
  %s1344 = scalar_lea.vmem [#allocation3], 96
  %v1345 = vld [vmem:[%s1344] sm:$0xff]
  %v1346 = vld [vmem:[%s1344 + $0x8] sm:$0xff]
  %v1347 = vld [vmem:[%s1344 + $0x10] sm:$0xff]
  %v1348 = vpack.c.bf16 %v1341, %v1341
  %v1349 = vld [vmem:[%s3] sm:$0xff]
  %v1350 = vld [vmem:[%s3 + $0x8] sm:$0xff]
  %v1351 = vld [vmem:[%s3 + $0x10] sm:$0xff]
  %v1352 = vld [vmem:[%s3 + $0x18] sm:$0xff]
  %v1353 = vld [vmem:[%s3 + $0x20] sm:$0xff]
  %v1354 = vld [vmem:[%s3 + $0x28] sm:$0xff]
  %v1355 = vld [vmem:[%s3 + $0x30] sm:$0xff]
  %v1356 = vld [vmem:[%s3 + $0x38] sm:$0xff]
  %v1357 = vld [vmem:[%s3 + $0x40] sm:$0xff]
  %v1358 = vld [vmem:[%s3 + $0x48] sm:$0xff]
  %v1359 = vld [vmem:[%s3 + $0x50] sm:$0xff]
  %v1360 = vld [vmem:[%s3 + $0x58] sm:$0xff]
  %v1361 = vld [vmem:[%s3 + $0x60] sm:$0xff]
  %v1362 = vld [vmem:[%s3 + $0x68] sm:$0xff]
  %v1363 = vld [vmem:[%s3 + $0x70] sm:$0xff]
  %v1364 = vld [vmem:[%s3 + $0x78] sm:$0xff]
  %v1381 = vunpack.c.l.b16 %v1349
  %v1382 = vunpack.c.h.b16 %v1349
  %v1383 = vunpack.c.l.b16 %v1350
  %v1384 = vunpack.c.h.b16 %v1350
  %v1385 = vunpack.c.l.b16 %v1351
  %v1386 = vunpack.c.h.b16 %v1351
  %v1387 = vunpack.c.l.b16 %v1352
  %v1388 = vunpack.c.h.b16 %v1352
  %v1389 = vunpack.c.l.b16 %v1353
  %v1390 = vunpack.c.h.b16 %v1353
  %v1391 = vunpack.c.l.b16 %v1354
  %v1392 = vunpack.c.h.b16 %v1354
  %v1393 = vunpack.c.l.b16 %v1355
  %v1394 = vunpack.c.h.b16 %v1355
  %v1395 = vunpack.c.l.b16 %v1356
  %v1396 = vunpack.c.h.b16 %v1356
  %v1397 = vunpack.c.l.b16 %v1357
  %v1398 = vunpack.c.h.b16 %v1357
  %v1399 = vunpack.c.l.b16 %v1358
  %v1400 = vunpack.c.h.b16 %v1358
  %v1401 = vunpack.c.l.b16 %v1359
  %v1402 = vunpack.c.h.b16 %v1359
  %v1403 = vunpack.c.l.b16 %v1360
  %v1404 = vunpack.c.h.b16 %v1360
  %v1405 = vunpack.c.l.b16 %v1361
  %v1406 = vunpack.c.h.b16 %v1361
  %v1407 = vunpack.c.l.b16 %v1362
  %v1408 = vunpack.c.h.b16 %v1362
  %v1409 = vunpack.c.l.b16 %v1363
  %v1410 = vunpack.c.h.b16 %v1363
  %v1411 = vunpack.c.l.b16 %v1364
  %v1412 = vunpack.c.h.b16 %v1364
  %v1413 = vpack.c.b16 %v1383, %v1381
  %v1414 = vpack.c.b16 %v1384, %v1382
  %v1415 = vpack.c.b16 %v1387, %v1385
  %v1416 = vpack.c.b16 %v1388, %v1386
  %v1417 = vpack.c.b16 %v1391, %v1389
  %v1418 = vpack.c.b16 %v1392, %v1390
  %v1419 = vpack.c.b16 %v1395, %v1393
  %v1420 = vpack.c.b16 %v1396, %v1394
  %v1421 = vpack.c.b16 %v1399, %v1397
  %v1422 = vpack.c.b16 %v1400, %v1398
  %v1423 = vpack.c.b16 %v1403, %v1401
  %v1424 = vpack.c.b16 %v1404, %v1402
  %v1425 = vpack.c.b16 %v1407, %v1405
  %v1426 = vpack.c.b16 %v1408, %v1406
  %v1427 = vpack.c.b16 %v1411, %v1409
  %v1428 = vpack.c.b16 %v1412, %v1410
  %1445 = vmatprep.subr.bf16.mxu0 %v1414
  %1446 = vmatpush1.bf16.msra.mxu0 %v1413
  %1447 = vmatprep.subr.bf16.mxu0 %v1416
  %1448 = vmatpush1.bf16.msra.mxu0 %v1415
  %1449 = vmatprep.subr.bf16.mxu0 %v1418
  %1450 = vmatpush1.bf16.msra.mxu0 %v1417
  %1451 = vmatprep.subr.bf16.mxu0 %v1420
  %1452 = vmatpush1.bf16.msra.mxu0 %v1419
  %1453 = vmatprep.subr.bf16.mxu0 %v1422
  %1454 = vmatpush1.bf16.msra.mxu0 %v1421
  %1455 = vmatprep.subr.bf16.mxu0 %v1424
  %1456 = vmatpush1.bf16.msra.mxu0 %v1423
  %1457 = vmatprep.subr.bf16.mxu0 %v1426
  %1458 = vmatpush1.bf16.msra.mxu0 %v1425
  %1459 = vmatprep.subr.bf16.mxu0 %v1428
  %1460 = vmatpush1.bf16.msra.mxu0 %v1427
  %1461 = vmatprep.subr.bf16.mxu0 0
  %1462 = vmatpush1.bf16.msra.mxu0 0
  %1463 = vmatprep.subr.bf16.mxu0 0
  %1464 = vmatpush1.bf16.msra.mxu0 0
  %1465 = vmatprep.subr.bf16.mxu0 0
  %1466 = vmatpush1.bf16.msra.mxu0 0
  %1467 = vmatprep.subr.bf16.mxu0 0
  %1468 = vmatpush1.bf16.msra.mxu0 0
  %1469 = vmatprep.subr.bf16.mxu0 0
  %1470 = vmatpush1.bf16.msra.mxu0 0
  %1471 = vmatprep.subr.bf16.mxu0 0
  %1472 = vmatpush1.bf16.msra.mxu0 0
  %1473 = vmatprep.subr.bf16.mxu0 0
  %1474 = vmatpush1.bf16.msra.mxu0 0
  %1475 = vmatprep.subr.bf16.mxu0 0
  %1476 = vmatpush1.bf16.msra.mxu0 0
  %1477 = vmatprep.mubr.bf16.mxu0 0
  %1478 = vmatmul.mubr.bf16.gmra.mrb[0].mxu0 %v1348
  %v1479 = vpop.f32.mrb[0].mxu0
  %v1480 = vadd.f32 0.0, %v1479
  %v1481 = vpop.f32.mrb[0].mxu0
  %v1482 = vadd.f32 0.0, %v1481
  %v1483 = vpop.f32.mrb[0].mxu0
  %v1484 = vpop.f32.mrb[0].mxu0
  %1485 = vdwg.mxu0
  %v1486 = vadd.f32 %v1345, %v1480
  %v1487 = vxor.u32 %v1486, 2147483648
  %v1488 = vmul.f32 %v1487, 1.442695
  %v1489 = vpow.pop %v1488
  %v1490 = vadd.f32 %v1489, 1.0
  %v1491 = vrcp.pop %v1490
  %v1492 = vmul.f32 1.0, %v1491
  %v1493 = vadd.f32 %v1346, %v1482
  %v1494 = vxor.u32 %v1493, 2147483648
  %v1495 = vmul.f32 %v1494, 1.442695
  %v1496 = vpow.pop %v1495
  %v1497 = vadd.f32 %v1496, 1.0
  %v1498 = vrcp.pop %v1497
  %v1499 = vmul.f32 1.0, %v1498
  %v1500 = vmul.f32 %v1341, %v1499
  %v1501 = vld [vmem:[%s4] sm:$0xff]
  %v1502 = vld [vmem:[%s4 + $0x8] sm:$0xff]
  %v1503 = vld [vmem:[%s4 + $0x10] sm:$0xff]
  %v1504 = vld [vmem:[%s4 + $0x18] sm:$0xff]
  %v1505 = vld [vmem:[%s4 + $0x20] sm:$0xff]
  %v1506 = vld [vmem:[%s4 + $0x28] sm:$0xff]
  %v1507 = vld [vmem:[%s4 + $0x30] sm:$0xff]
  %v1508 = vld [vmem:[%s4 + $0x38] sm:$0xff]
  %v1509 = vld [vmem:[%s4 + $0x40] sm:$0xff]
  %v1510 = vld [vmem:[%s4 + $0x48] sm:$0xff]
  %v1511 = vld [vmem:[%s4 + $0x50] sm:$0xff]
  %v1512 = vld [vmem:[%s4 + $0x58] sm:$0xff]
  %v1513 = vld [vmem:[%s4 + $0x60] sm:$0xff]
  %v1514 = vld [vmem:[%s4 + $0x68] sm:$0xff]
  %v1515 = vld [vmem:[%s4 + $0x70] sm:$0xff]
  %v1516 = vld [vmem:[%s4 + $0x78] sm:$0xff]
  %1517 = vmatprep.subr.mxu0 0.0
  %1518 = vmatpush1.msra.mxu0 %v1501
  %1519 = vmatprep.subr.mxu0 0.0
  %1520 = vmatpush1.msra.mxu0 %v1502
  %1521 = vmatprep.subr.mxu0 0.0
  %1522 = vmatpush1.msra.mxu0 %v1503
  %1523 = vmatprep.subr.mxu0 0.0
  %1524 = vmatpush1.msra.mxu0 %v1504
  %1525 = vmatprep.subr.mxu0 0.0
  %1526 = vmatpush1.msra.mxu0 %v1505
  %1527 = vmatprep.subr.mxu0 0.0
  %1528 = vmatpush1.msra.mxu0 %v1506
  %1529 = vmatprep.subr.mxu0 0.0
  %1530 = vmatpush1.msra.mxu0 %v1507
  %1531 = vmatprep.subr.mxu0 0.0
  %1532 = vmatpush1.msra.mxu0 %v1508
  %1533 = vmatprep.subr.mxu0 0.0
  %1534 = vmatpush1.msra.mxu0 %v1509
  %1535 = vmatprep.subr.mxu0 0.0
  %1536 = vmatpush1.msra.mxu0 %v1510
  %1537 = vmatprep.subr.mxu0 0.0
  %1538 = vmatpush1.msra.mxu0 %v1511
  %1539 = vmatprep.subr.mxu0 0.0
  %1540 = vmatpush1.msra.mxu0 %v1512
  %1541 = vmatprep.subr.mxu0 0.0
  %1542 = vmatpush1.msra.mxu0 %v1513
  %1543 = vmatprep.subr.mxu0 0.0
  %1544 = vmatpush1.msra.mxu0 %v1514
  %1545 = vmatprep.subr.mxu0 0.0
  %1546 = vmatpush1.msra.mxu0 %v1515
  %1547 = vmatprep.subr.mxu0 0.0
  %1548 = vmatpush1.msra.mxu0 %v1516
  %1549 = vmatprep.subr.mxu0 0.0
  %1550 = vmatpush1.msra.mxu0 0.0
  %1551 = vmatprep.subr.mxu0 0.0
  %1552 = vmatpush1.msra.mxu0 0.0
  %1553 = vmatprep.subr.mxu0 0.0
  %1554 = vmatpush1.msra.mxu0 0.0
  %1555 = vmatprep.subr.mxu0 0.0
  %1556 = vmatpush1.msra.mxu0 0.0
  %1557 = vmatprep.subr.mxu0 0.0
  %1558 = vmatpush1.msra.mxu0 0.0
  %1559 = vmatprep.subr.mxu0 0.0
  %1560 = vmatpush1.msra.mxu0 0.0
  %1561 = vmatprep.subr.mxu0 0.0
  %1562 = vmatpush1.msra.mxu0 0.0
  %1563 = vmatprep.subr.mxu0 0.0
  %1564 = vmatpush1.msra.mxu0 0.0
  %1565 = vmatprep.subr.mxu0 0.0
  %1566 = vmatpush1.msra.mxu0 0.0
  %1567 = vmatprep.subr.mxu0 0.0
  %1568 = vmatpush1.msra.mxu0 0.0
  %1569 = vmatprep.subr.mxu0 0.0
  %1570 = vmatpush1.msra.mxu0 0.0
  %1571 = vmatprep.subr.mxu0 0.0
  %1572 = vmatpush1.msra.mxu0 0.0
  %1573 = vmatprep.subr.mxu0 0.0
  %1574 = vmatpush1.msra.mxu0 0.0
  %1575 = vmatprep.subr.mxu0 0.0
  %1576 = vmatpush1.msra.mxu0 0.0
  %1577 = vmatprep.subr.mxu0 0.0
  %1578 = vmatpush1.msra.mxu0 0.0
  %1579 = vmatprep.subr.mxu0 0.0
  %1580 = vmatpush1.msra.mxu0 0.0
  %1581 = vmatprep.mubr.f32.mxu0 0.0
  %1582 = vmatmul.mubr.f32.gmra.mrb[0].mxu0 %v1500
  %v1583 = vpop.f32.mrb[0].mxu0
  %v1584 = vadd.f32 0.0, %v1583
  %v1585 = vpop.f32.mrb[0].mxu0
  %1586 = vdwg.mxu0
  %v1587 = vadd.f32 %v1347, %v1584
  %v1588 = vtanh.pop %v1587
  %v1589 = vsub.f32 1.0, %v1492
  %v1590 = vmul.f32 %v1341, %v1589
  %v1591 = vmul.f32 %v1492, %v1588
  %v1592 = vadd.f32 %v1590, %v1591
  %s1593 = scalar_lea.vmem %s5, 32
  %1594 = vst [vmem:[%s1593] sm:$0xff] %v1592
  %s1595 = scalar_lea.vmem [#allocation3], 120
  %v1596 = vld [vmem:[%s1595] sm:$0xff]
  %v1597 = vld [vmem:[%s1595 + $0x8] sm:$0xff]
  %v1598 = vld [vmem:[%s1595 + $0x10] sm:$0xff]
  %v1599 = vpack.c.bf16 %v1592, %v1592
  %v1600 = vld [vmem:[%s3] sm:$0xff]
  %v1601 = vld [vmem:[%s3 + $0x8] sm:$0xff]
  %v1602 = vld [vmem:[%s3 + $0x10] sm:$0xff]
  %v1603 = vld [vmem:[%s3 + $0x18] sm:$0xff]
  %v1604 = vld [vmem:[%s3 + $0x20] sm:$0xff]
  %v1605 = vld [vmem:[%s3 + $0x28] sm:$0xff]
  %v1606 = vld [vmem:[%s3 + $0x30] sm:$0xff]
  %v1607 = vld [vmem:[%s3 + $0x38] sm:$0xff]
  %v1608 = vld [vmem:[%s3 + $0x40] sm:$0xff]
  %v1609 = vld [vmem:[%s3 + $0x48] sm:$0xff]
  %v1610 = vld [vmem:[%s3 + $0x50] sm:$0xff]
  %v1611 = vld [vmem:[%s3 + $0x58] sm:$0xff]
  %v1612 = vld [vmem:[%s3 + $0x60] sm:$0xff]
  %v1613 = vld [vmem:[%s3 + $0x68] sm:$0xff]
  %v1614 = vld [vmem:[%s3 + $0x70] sm:$0xff]
  %v1615 = vld [vmem:[%s3 + $0x78] sm:$0xff]
  %v1632 = vunpack.c.l.b16 %v1600
  %v1633 = vunpack.c.h.b16 %v1600
  %v1634 = vunpack.c.l.b16 %v1601
  %v1635 = vunpack.c.h.b16 %v1601
  %v1636 = vunpack.c.l.b16 %v1602
  %v1637 = vunpack.c.h.b16 %v1602
  %v1638 = vunpack.c.l.b16 %v1603
  %v1639 = vunpack.c.h.b16 %v1603
  %v1640 = vunpack.c.l.b16 %v1604
  %v1641 = vunpack.c.h.b16 %v1604
  %v1642 = vunpack.c.l.b16 %v1605
  %v1643 = vunpack.c.h.b16 %v1605
  %v1644 = vunpack.c.l.b16 %v1606
  %v1645 = vunpack.c.h.b16 %v1606
  %v1646 = vunpack.c.l.b16 %v1607
  %v1647 = vunpack.c.h.b16 %v1607
  %v1648 = vunpack.c.l.b16 %v1608
  %v1649 = vunpack.c.h.b16 %v1608
  %v1650 = vunpack.c.l.b16 %v1609
  %v1651 = vunpack.c.h.b16 %v1609
  %v1652 = vunpack.c.l.b16 %v1610
  %v1653 = vunpack.c.h.b16 %v1610
  %v1654 = vunpack.c.l.b16 %v1611
  %v1655 = vunpack.c.h.b16 %v1611
  %v1656 = vunpack.c.l.b16 %v1612
  %v1657 = vunpack.c.h.b16 %v1612
  %v1658 = vunpack.c.l.b16 %v1613
  %v1659 = vunpack.c.h.b16 %v1613
  %v1660 = vunpack.c.l.b16 %v1614
  %v1661 = vunpack.c.h.b16 %v1614
  %v1662 = vunpack.c.l.b16 %v1615
  %v1663 = vunpack.c.h.b16 %v1615
  %v1664 = vpack.c.b16 %v1634, %v1632
  %v1665 = vpack.c.b16 %v1635, %v1633
  %v1666 = vpack.c.b16 %v1638, %v1636
  %v1667 = vpack.c.b16 %v1639, %v1637
  %v1668 = vpack.c.b16 %v1642, %v1640
  %v1669 = vpack.c.b16 %v1643, %v1641
  %v1670 = vpack.c.b16 %v1646, %v1644
  %v1671 = vpack.c.b16 %v1647, %v1645
  %v1672 = vpack.c.b16 %v1650, %v1648
  %v1673 = vpack.c.b16 %v1651, %v1649
  %v1674 = vpack.c.b16 %v1654, %v1652
  %v1675 = vpack.c.b16 %v1655, %v1653
  %v1676 = vpack.c.b16 %v1658, %v1656
  %v1677 = vpack.c.b16 %v1659, %v1657
  %v1678 = vpack.c.b16 %v1662, %v1660
  %v1679 = vpack.c.b16 %v1663, %v1661
  %1696 = vmatprep.subr.bf16.mxu0 %v1665
  %1697 = vmatpush1.bf16.msra.mxu0 %v1664
  %1698 = vmatprep.subr.bf16.mxu0 %v1667
  %1699 = vmatpush1.bf16.msra.mxu0 %v1666
  %1700 = vmatprep.subr.bf16.mxu0 %v1669
  %1701 = vmatpush1.bf16.msra.mxu0 %v1668
  %1702 = vmatprep.subr.bf16.mxu0 %v1671
  %1703 = vmatpush1.bf16.msra.mxu0 %v1670
  %1704 = vmatprep.subr.bf16.mxu0 %v1673
  %1705 = vmatpush1.bf16.msra.mxu0 %v1672
  %1706 = vmatprep.subr.bf16.mxu0 %v1675
  %1707 = vmatpush1.bf16.msra.mxu0 %v1674
  %1708 = vmatprep.subr.bf16.mxu0 %v1677
  %1709 = vmatpush1.bf16.msra.mxu0 %v1676
  %1710 = vmatprep.subr.bf16.mxu0 %v1679
  %1711 = vmatpush1.bf16.msra.mxu0 %v1678
  %1712 = vmatprep.subr.bf16.mxu0 0
  %1713 = vmatpush1.bf16.msra.mxu0 0
  %1714 = vmatprep.subr.bf16.mxu0 0
  %1715 = vmatpush1.bf16.msra.mxu0 0
  %1716 = vmatprep.subr.bf16.mxu0 0
  %1717 = vmatpush1.bf16.msra.mxu0 0
  %1718 = vmatprep.subr.bf16.mxu0 0
  %1719 = vmatpush1.bf16.msra.mxu0 0
  %1720 = vmatprep.subr.bf16.mxu0 0
  %1721 = vmatpush1.bf16.msra.mxu0 0
  %1722 = vmatprep.subr.bf16.mxu0 0
  %1723 = vmatpush1.bf16.msra.mxu0 0
  %1724 = vmatprep.subr.bf16.mxu0 0
  %1725 = vmatpush1.bf16.msra.mxu0 0
  %1726 = vmatprep.subr.bf16.mxu0 0
  %1727 = vmatpush1.bf16.msra.mxu0 0
  %1728 = vmatprep.mubr.bf16.mxu0 0
  %1729 = vmatmul.mubr.bf16.gmra.mrb[0].mxu0 %v1599
  %v1730 = vpop.f32.mrb[0].mxu0
  %v1731 = vadd.f32 0.0, %v1730
  %v1732 = vpop.f32.mrb[0].mxu0
  %v1733 = vadd.f32 0.0, %v1732
  %v1734 = vpop.f32.mrb[0].mxu0
  %v1735 = vpop.f32.mrb[0].mxu0
  %1736 = vdwg.mxu0
  %v1737 = vadd.f32 %v1596, %v1731
  %v1738 = vxor.u32 %v1737, 2147483648
  %v1739 = vmul.f32 %v1738, 1.442695
  %v1740 = vpow.pop %v1739
  %v1741 = vadd.f32 %v1740, 1.0
  %v1742 = vrcp.pop %v1741
  %v1743 = vmul.f32 1.0, %v1742
  %v1744 = vadd.f32 %v1597, %v1733
  %v1745 = vxor.u32 %v1744, 2147483648
  %v1746 = vmul.f32 %v1745, 1.442695
  %v1747 = vpow.pop %v1746
  %v1748 = vadd.f32 %v1747, 1.0
  %v1749 = vrcp.pop %v1748
  %v1750 = vmul.f32 1.0, %v1749
  %v1751 = vmul.f32 %v1592, %v1750
  %v1752 = vld [vmem:[%s4] sm:$0xff]
  %v1753 = vld [vmem:[%s4 + $0x8] sm:$0xff]
  %v1754 = vld [vmem:[%s4 + $0x10] sm:$0xff]
  %v1755 = vld [vmem:[%s4 + $0x18] sm:$0xff]
  %v1756 = vld [vmem:[%s4 + $0x20] sm:$0xff]
  %v1757 = vld [vmem:[%s4 + $0x28] sm:$0xff]
  %v1758 = vld [vmem:[%s4 + $0x30] sm:$0xff]
  %v1759 = vld [vmem:[%s4 + $0x38] sm:$0xff]
  %v1760 = vld [vmem:[%s4 + $0x40] sm:$0xff]
  %v1761 = vld [vmem:[%s4 + $0x48] sm:$0xff]
  %v1762 = vld [vmem:[%s4 + $0x50] sm:$0xff]
  %v1763 = vld [vmem:[%s4 + $0x58] sm:$0xff]
  %v1764 = vld [vmem:[%s4 + $0x60] sm:$0xff]
  %v1765 = vld [vmem:[%s4 + $0x68] sm:$0xff]
  %v1766 = vld [vmem:[%s4 + $0x70] sm:$0xff]
  %v1767 = vld [vmem:[%s4 + $0x78] sm:$0xff]
  %1768 = vmatprep.subr.mxu0 0.0
  %1769 = vmatpush1.msra.mxu0 %v1752
  %1770 = vmatprep.subr.mxu0 0.0
  %1771 = vmatpush1.msra.mxu0 %v1753
  %1772 = vmatprep.subr.mxu0 0.0
  %1773 = vmatpush1.msra.mxu0 %v1754
  %1774 = vmatprep.subr.mxu0 0.0
  %1775 = vmatpush1.msra.mxu0 %v1755
  %1776 = vmatprep.subr.mxu0 0.0
  %1777 = vmatpush1.msra.mxu0 %v1756
  %1778 = vmatprep.subr.mxu0 0.0
  %1779 = vmatpush1.msra.mxu0 %v1757
  %1780 = vmatprep.subr.mxu0 0.0
  %1781 = vmatpush1.msra.mxu0 %v1758
  %1782 = vmatprep.subr.mxu0 0.0
  %1783 = vmatpush1.msra.mxu0 %v1759
  %1784 = vmatprep.subr.mxu0 0.0
  %1785 = vmatpush1.msra.mxu0 %v1760
  %1786 = vmatprep.subr.mxu0 0.0
  %1787 = vmatpush1.msra.mxu0 %v1761
  %1788 = vmatprep.subr.mxu0 0.0
  %1789 = vmatpush1.msra.mxu0 %v1762
  %1790 = vmatprep.subr.mxu0 0.0
  %1791 = vmatpush1.msra.mxu0 %v1763
  %1792 = vmatprep.subr.mxu0 0.0
  %1793 = vmatpush1.msra.mxu0 %v1764
  %1794 = vmatprep.subr.mxu0 0.0
  %1795 = vmatpush1.msra.mxu0 %v1765
  %1796 = vmatprep.subr.mxu0 0.0
  %1797 = vmatpush1.msra.mxu0 %v1766
  %1798 = vmatprep.subr.mxu0 0.0
  %1799 = vmatpush1.msra.mxu0 %v1767
  %1800 = vmatprep.subr.mxu0 0.0
  %1801 = vmatpush1.msra.mxu0 0.0
  %1802 = vmatprep.subr.mxu0 0.0
  %1803 = vmatpush1.msra.mxu0 0.0
  %1804 = vmatprep.subr.mxu0 0.0
  %1805 = vmatpush1.msra.mxu0 0.0
  %1806 = vmatprep.subr.mxu0 0.0
  %1807 = vmatpush1.msra.mxu0 0.0
  %1808 = vmatprep.subr.mxu0 0.0
  %1809 = vmatpush1.msra.mxu0 0.0
  %1810 = vmatprep.subr.mxu0 0.0
  %1811 = vmatpush1.msra.mxu0 0.0
  %1812 = vmatprep.subr.mxu0 0.0
  %1813 = vmatpush1.msra.mxu0 0.0
  %1814 = vmatprep.subr.mxu0 0.0
  %1815 = vmatpush1.msra.mxu0 0.0
  %1816 = vmatprep.subr.mxu0 0.0
  %1817 = vmatpush1.msra.mxu0 0.0
  %1818 = vmatprep.subr.mxu0 0.0
  %1819 = vmatpush1.msra.mxu0 0.0
  %1820 = vmatprep.subr.mxu0 0.0
  %1821 = vmatpush1.msra.mxu0 0.0
  %1822 = vmatprep.subr.mxu0 0.0
  %1823 = vmatpush1.msra.mxu0 0.0
  %1824 = vmatprep.subr.mxu0 0.0
  %1825 = vmatpush1.msra.mxu0 0.0
  %1826 = vmatprep.subr.mxu0 0.0
  %1827 = vmatpush1.msra.mxu0 0.0
  %1828 = vmatprep.subr.mxu0 0.0
  %1829 = vmatpush1.msra.mxu0 0.0
  %1830 = vmatprep.subr.mxu0 0.0
  %1831 = vmatpush1.msra.mxu0 0.0
  %1832 = vmatprep.mubr.f32.mxu0 0.0
  %1833 = vmatmul.mubr.f32.gmra.mrb[0].mxu0 %v1751
  %v1834 = vpop.f32.mrb[0].mxu0
  %v1835 = vadd.f32 0.0, %v1834
  %v1836 = vpop.f32.mrb[0].mxu0
  %1837 = vdwg.mxu0
  %v1838 = vadd.f32 %v1598, %v1835
  %v1839 = vtanh.pop %v1838
  %v1840 = vsub.f32 1.0, %v1743
  %v1841 = vmul.f32 %v1592, %v1840
  %v1842 = vmul.f32 %v1743, %v1839
  %v1843 = vadd.f32 %v1841, %v1842
  %s1844 = scalar_lea.vmem %s5, 40
  %1845 = vst [vmem:[%s1844] sm:$0xff] %v1843
  %s1846 = scalar_lea.vmem [#allocation3], 144
  %v1847 = vld [vmem:[%s1846] sm:$0xff]
  %v1848 = vld [vmem:[%s1846 + $0x8] sm:$0xff]
  %v1849 = vld [vmem:[%s1846 + $0x10] sm:$0xff]
  %v1850 = vpack.c.bf16 %v1843, %v1843
  %v1851 = vld [vmem:[%s3] sm:$0xff]
  %v1852 = vld [vmem:[%s3 + $0x8] sm:$0xff]
  %v1853 = vld [vmem:[%s3 + $0x10] sm:$0xff]
  %v1854 = vld [vmem:[%s3 + $0x18] sm:$0xff]
  %v1855 = vld [vmem:[%s3 + $0x20] sm:$0xff]
  %v1856 = vld [vmem:[%s3 + $0x28] sm:$0xff]
  %v1857 = vld [vmem:[%s3 + $0x30] sm:$0xff]
  %v1858 = vld [vmem:[%s3 + $0x38] sm:$0xff]
  %v1859 = vld [vmem:[%s3 + $0x40] sm:$0xff]
  %v1860 = vld [vmem:[%s3 + $0x48] sm:$0xff]
  %v1861 = vld [vmem:[%s3 + $0x50] sm:$0xff]
  %v1862 = vld [vmem:[%s3 + $0x58] sm:$0xff]
  %v1863 = vld [vmem:[%s3 + $0x60] sm:$0xff]
  %v1864 = vld [vmem:[%s3 + $0x68] sm:$0xff]
  %v1865 = vld [vmem:[%s3 + $0x70] sm:$0xff]
  %v1866 = vld [vmem:[%s3 + $0x78] sm:$0xff]
  %v1883 = vunpack.c.l.b16 %v1851
  %v1884 = vunpack.c.h.b16 %v1851
  %v1885 = vunpack.c.l.b16 %v1852
  %v1886 = vunpack.c.h.b16 %v1852
  %v1887 = vunpack.c.l.b16 %v1853
  %v1888 = vunpack.c.h.b16 %v1853
  %v1889 = vunpack.c.l.b16 %v1854
  %v1890 = vunpack.c.h.b16 %v1854
  %v1891 = vunpack.c.l.b16 %v1855
  %v1892 = vunpack.c.h.b16 %v1855
  %v1893 = vunpack.c.l.b16 %v1856
  %v1894 = vunpack.c.h.b16 %v1856
  %v1895 = vunpack.c.l.b16 %v1857
  %v1896 = vunpack.c.h.b16 %v1857
  %v1897 = vunpack.c.l.b16 %v1858
  %v1898 = vunpack.c.h.b16 %v1858
  %v1899 = vunpack.c.l.b16 %v1859
  %v1900 = vunpack.c.h.b16 %v1859
  %v1901 = vunpack.c.l.b16 %v1860
  %v1902 = vunpack.c.h.b16 %v1860
  %v1903 = vunpack.c.l.b16 %v1861
  %v1904 = vunpack.c.h.b16 %v1861
  %v1905 = vunpack.c.l.b16 %v1862
  %v1906 = vunpack.c.h.b16 %v1862
  %v1907 = vunpack.c.l.b16 %v1863
  %v1908 = vunpack.c.h.b16 %v1863
  %v1909 = vunpack.c.l.b16 %v1864
  %v1910 = vunpack.c.h.b16 %v1864
  %v1911 = vunpack.c.l.b16 %v1865
  %v1912 = vunpack.c.h.b16 %v1865
  %v1913 = vunpack.c.l.b16 %v1866
  %v1914 = vunpack.c.h.b16 %v1866
  %v1915 = vpack.c.b16 %v1885, %v1883
  %v1916 = vpack.c.b16 %v1886, %v1884
  %v1917 = vpack.c.b16 %v1889, %v1887
  %v1918 = vpack.c.b16 %v1890, %v1888
  %v1919 = vpack.c.b16 %v1893, %v1891
  %v1920 = vpack.c.b16 %v1894, %v1892
  %v1921 = vpack.c.b16 %v1897, %v1895
  %v1922 = vpack.c.b16 %v1898, %v1896
  %v1923 = vpack.c.b16 %v1901, %v1899
  %v1924 = vpack.c.b16 %v1902, %v1900
  %v1925 = vpack.c.b16 %v1905, %v1903
  %v1926 = vpack.c.b16 %v1906, %v1904
  %v1927 = vpack.c.b16 %v1909, %v1907
  %v1928 = vpack.c.b16 %v1910, %v1908
  %v1929 = vpack.c.b16 %v1913, %v1911
  %v1930 = vpack.c.b16 %v1914, %v1912
  %1947 = vmatprep.subr.bf16.mxu0 %v1916
  %1948 = vmatpush1.bf16.msra.mxu0 %v1915
  %1949 = vmatprep.subr.bf16.mxu0 %v1918
  %1950 = vmatpush1.bf16.msra.mxu0 %v1917
  %1951 = vmatprep.subr.bf16.mxu0 %v1920
  %1952 = vmatpush1.bf16.msra.mxu0 %v1919
  %1953 = vmatprep.subr.bf16.mxu0 %v1922
  %1954 = vmatpush1.bf16.msra.mxu0 %v1921
  %1955 = vmatprep.subr.bf16.mxu0 %v1924
  %1956 = vmatpush1.bf16.msra.mxu0 %v1923
  %1957 = vmatprep.subr.bf16.mxu0 %v1926
  %1958 = vmatpush1.bf16.msra.mxu0 %v1925
  %1959 = vmatprep.subr.bf16.mxu0 %v1928
  %1960 = vmatpush1.bf16.msra.mxu0 %v1927
  %1961 = vmatprep.subr.bf16.mxu0 %v1930
  %1962 = vmatpush1.bf16.msra.mxu0 %v1929
  %1963 = vmatprep.subr.bf16.mxu0 0
  %1964 = vmatpush1.bf16.msra.mxu0 0
  %1965 = vmatprep.subr.bf16.mxu0 0
  %1966 = vmatpush1.bf16.msra.mxu0 0
  %1967 = vmatprep.subr.bf16.mxu0 0
  %1968 = vmatpush1.bf16.msra.mxu0 0
  %1969 = vmatprep.subr.bf16.mxu0 0
  %1970 = vmatpush1.bf16.msra.mxu0 0
  %1971 = vmatprep.subr.bf16.mxu0 0
  %1972 = vmatpush1.bf16.msra.mxu0 0
  %1973 = vmatprep.subr.bf16.mxu0 0
  %1974 = vmatpush1.bf16.msra.mxu0 0
  %1975 = vmatprep.subr.bf16.mxu0 0
  %1976 = vmatpush1.bf16.msra.mxu0 0
  %1977 = vmatprep.subr.bf16.mxu0 0
  %1978 = vmatpush1.bf16.msra.mxu0 0
  %1979 = vmatprep.mubr.bf16.mxu0 0
  %1980 = vmatmul.mubr.bf16.gmra.mrb[0].mxu0 %v1850
  %v1981 = vpop.f32.mrb[0].mxu0
  %v1982 = vadd.f32 0.0, %v1981
  %v1983 = vpop.f32.mrb[0].mxu0
  %v1984 = vadd.f32 0.0, %v1983
  %v1985 = vpop.f32.mrb[0].mxu0
  %v1986 = vpop.f32.mrb[0].mxu0
  %1987 = vdwg.mxu0
  %v1988 = vadd.f32 %v1847, %v1982
  %v1989 = vxor.u32 %v1988, 2147483648
  %v1990 = vmul.f32 %v1989, 1.442695
  %v1991 = vpow.pop %v1990
  %v1992 = vadd.f32 %v1991, 1.0
  %v1993 = vrcp.pop %v1992
  %v1994 = vmul.f32 1.0, %v1993
  %v1995 = vadd.f32 %v1848, %v1984
  %v1996 = vxor.u32 %v1995, 2147483648
  %v1997 = vmul.f32 %v1996, 1.442695
  %v1998 = vpow.pop %v1997
  %v1999 = vadd.f32 %v1998, 1.0
  %v2000 = vrcp.pop %v1999
  %v2001 = vmul.f32 1.0, %v2000
  %v2002 = vmul.f32 %v1843, %v2001
  %v2003 = vld [vmem:[%s4] sm:$0xff]
  %v2004 = vld [vmem:[%s4 + $0x8] sm:$0xff]
  %v2005 = vld [vmem:[%s4 + $0x10] sm:$0xff]
  %v2006 = vld [vmem:[%s4 + $0x18] sm:$0xff]
  %v2007 = vld [vmem:[%s4 + $0x20] sm:$0xff]
  %v2008 = vld [vmem:[%s4 + $0x28] sm:$0xff]
  %v2009 = vld [vmem:[%s4 + $0x30] sm:$0xff]
  %v2010 = vld [vmem:[%s4 + $0x38] sm:$0xff]
  %v2011 = vld [vmem:[%s4 + $0x40] sm:$0xff]
  %v2012 = vld [vmem:[%s4 + $0x48] sm:$0xff]
  %v2013 = vld [vmem:[%s4 + $0x50] sm:$0xff]
  %v2014 = vld [vmem:[%s4 + $0x58] sm:$0xff]
  %v2015 = vld [vmem:[%s4 + $0x60] sm:$0xff]
  %v2016 = vld [vmem:[%s4 + $0x68] sm:$0xff]
  %v2017 = vld [vmem:[%s4 + $0x70] sm:$0xff]
  %v2018 = vld [vmem:[%s4 + $0x78] sm:$0xff]
  %2019 = vmatprep.subr.mxu0 0.0
  %2020 = vmatpush1.msra.mxu0 %v2003
  %2021 = vmatprep.subr.mxu0 0.0
  %2022 = vmatpush1.msra.mxu0 %v2004
  %2023 = vmatprep.subr.mxu0 0.0
  %2024 = vmatpush1.msra.mxu0 %v2005
  %2025 = vmatprep.subr.mxu0 0.0
  %2026 = vmatpush1.msra.mxu0 %v2006
  %2027 = vmatprep.subr.mxu0 0.0
  %2028 = vmatpush1.msra.mxu0 %v2007
  %2029 = vmatprep.subr.mxu0 0.0
  %2030 = vmatpush1.msra.mxu0 %v2008
  %2031 = vmatprep.subr.mxu0 0.0
  %2032 = vmatpush1.msra.mxu0 %v2009
  %2033 = vmatprep.subr.mxu0 0.0
  %2034 = vmatpush1.msra.mxu0 %v2010
  %2035 = vmatprep.subr.mxu0 0.0
  %2036 = vmatpush1.msra.mxu0 %v2011
  %2037 = vmatprep.subr.mxu0 0.0
  %2038 = vmatpush1.msra.mxu0 %v2012
  %2039 = vmatprep.subr.mxu0 0.0
  %2040 = vmatpush1.msra.mxu0 %v2013
  %2041 = vmatprep.subr.mxu0 0.0
  %2042 = vmatpush1.msra.mxu0 %v2014
  %2043 = vmatprep.subr.mxu0 0.0
  %2044 = vmatpush1.msra.mxu0 %v2015
  %2045 = vmatprep.subr.mxu0 0.0
  %2046 = vmatpush1.msra.mxu0 %v2016
  %2047 = vmatprep.subr.mxu0 0.0
  %2048 = vmatpush1.msra.mxu0 %v2017
  %2049 = vmatprep.subr.mxu0 0.0
  %2050 = vmatpush1.msra.mxu0 %v2018
  %2051 = vmatprep.subr.mxu0 0.0
  %2052 = vmatpush1.msra.mxu0 0.0
  %2053 = vmatprep.subr.mxu0 0.0
  %2054 = vmatpush1.msra.mxu0 0.0
  %2055 = vmatprep.subr.mxu0 0.0
  %2056 = vmatpush1.msra.mxu0 0.0
  %2057 = vmatprep.subr.mxu0 0.0
  %2058 = vmatpush1.msra.mxu0 0.0
  %2059 = vmatprep.subr.mxu0 0.0
  %2060 = vmatpush1.msra.mxu0 0.0
  %2061 = vmatprep.subr.mxu0 0.0
  %2062 = vmatpush1.msra.mxu0 0.0
  %2063 = vmatprep.subr.mxu0 0.0
  %2064 = vmatpush1.msra.mxu0 0.0
  %2065 = vmatprep.subr.mxu0 0.0
  %2066 = vmatpush1.msra.mxu0 0.0
  %2067 = vmatprep.subr.mxu0 0.0
  %2068 = vmatpush1.msra.mxu0 0.0
  %2069 = vmatprep.subr.mxu0 0.0
  %2070 = vmatpush1.msra.mxu0 0.0
  %2071 = vmatprep.subr.mxu0 0.0
  %2072 = vmatpush1.msra.mxu0 0.0
  %2073 = vmatprep.subr.mxu0 0.0
  %2074 = vmatpush1.msra.mxu0 0.0
  %2075 = vmatprep.subr.mxu0 0.0
  %2076 = vmatpush1.msra.mxu0 0.0
  %2077 = vmatprep.subr.mxu0 0.0
  %2078 = vmatpush1.msra.mxu0 0.0
  %2079 = vmatprep.subr.mxu0 0.0
  %2080 = vmatpush1.msra.mxu0 0.0
  %2081 = vmatprep.subr.mxu0 0.0
  %2082 = vmatpush1.msra.mxu0 0.0
  %2083 = vmatprep.mubr.f32.mxu0 0.0
  %2084 = vmatmul.mubr.f32.gmra.mrb[0].mxu0 %v2002
  %v2085 = vpop.f32.mrb[0].mxu0
  %v2086 = vadd.f32 0.0, %v2085
  %v2087 = vpop.f32.mrb[0].mxu0
  %2088 = vdwg.mxu0
  %v2089 = vadd.f32 %v1849, %v2086
  %v2090 = vtanh.pop %v2089
  %v2091 = vsub.f32 1.0, %v1994
  %v2092 = vmul.f32 %v1843, %v2091
  %v2093 = vmul.f32 %v1994, %v2090
  %v2094 = vadd.f32 %v2092, %v2093
  %s2095 = scalar_lea.vmem %s5, 48
  %2096 = vst [vmem:[%s2095] sm:$0xff] %v2094
  %s2097 = scalar_lea.vmem [#allocation3], 168
  %v2098 = vld [vmem:[%s2097] sm:$0xff]
  %v2099 = vld [vmem:[%s2097 + $0x8] sm:$0xff]
  %v2100 = vld [vmem:[%s2097 + $0x10] sm:$0xff]
  %v2101 = vpack.c.bf16 %v2094, %v2094
  %v2102 = vld [vmem:[%s3] sm:$0xff]
  %v2103 = vld [vmem:[%s3 + $0x8] sm:$0xff]
  %v2104 = vld [vmem:[%s3 + $0x10] sm:$0xff]
  %v2105 = vld [vmem:[%s3 + $0x18] sm:$0xff]
  %v2106 = vld [vmem:[%s3 + $0x20] sm:$0xff]
  %v2107 = vld [vmem:[%s3 + $0x28] sm:$0xff]
  %v2108 = vld [vmem:[%s3 + $0x30] sm:$0xff]
  %v2109 = vld [vmem:[%s3 + $0x38] sm:$0xff]
  %v2110 = vld [vmem:[%s3 + $0x40] sm:$0xff]
  %v2111 = vld [vmem:[%s3 + $0x48] sm:$0xff]
  %v2112 = vld [vmem:[%s3 + $0x50] sm:$0xff]
  %v2113 = vld [vmem:[%s3 + $0x58] sm:$0xff]
  %v2114 = vld [vmem:[%s3 + $0x60] sm:$0xff]
  %v2115 = vld [vmem:[%s3 + $0x68] sm:$0xff]
  %v2116 = vld [vmem:[%s3 + $0x70] sm:$0xff]
  %v2117 = vld [vmem:[%s3 + $0x78] sm:$0xff]
  %v2134 = vunpack.c.l.b16 %v2102
  %v2135 = vunpack.c.h.b16 %v2102
  %v2136 = vunpack.c.l.b16 %v2103
  %v2137 = vunpack.c.h.b16 %v2103
  %v2138 = vunpack.c.l.b16 %v2104
  %v2139 = vunpack.c.h.b16 %v2104
  %v2140 = vunpack.c.l.b16 %v2105
  %v2141 = vunpack.c.h.b16 %v2105
  %v2142 = vunpack.c.l.b16 %v2106
  %v2143 = vunpack.c.h.b16 %v2106
  %v2144 = vunpack.c.l.b16 %v2107
  %v2145 = vunpack.c.h.b16 %v2107
  %v2146 = vunpack.c.l.b16 %v2108
  %v2147 = vunpack.c.h.b16 %v2108
  %v2148 = vunpack.c.l.b16 %v2109
  %v2149 = vunpack.c.h.b16 %v2109
  %v2150 = vunpack.c.l.b16 %v2110
  %v2151 = vunpack.c.h.b16 %v2110
  %v2152 = vunpack.c.l.b16 %v2111
  %v2153 = vunpack.c.h.b16 %v2111
  %v2154 = vunpack.c.l.b16 %v2112
  %v2155 = vunpack.c.h.b16 %v2112
  %v2156 = vunpack.c.l.b16 %v2113
  %v2157 = vunpack.c.h.b16 %v2113
  %v2158 = vunpack.c.l.b16 %v2114
  %v2159 = vunpack.c.h.b16 %v2114
  %v2160 = vunpack.c.l.b16 %v2115
  %v2161 = vunpack.c.h.b16 %v2115
  %v2162 = vunpack.c.l.b16 %v2116
  %v2163 = vunpack.c.h.b16 %v2116
  %v2164 = vunpack.c.l.b16 %v2117
  %v2165 = vunpack.c.h.b16 %v2117
  %v2166 = vpack.c.b16 %v2136, %v2134
  %v2167 = vpack.c.b16 %v2137, %v2135
  %v2168 = vpack.c.b16 %v2140, %v2138
  %v2169 = vpack.c.b16 %v2141, %v2139
  %v2170 = vpack.c.b16 %v2144, %v2142
  %v2171 = vpack.c.b16 %v2145, %v2143
  %v2172 = vpack.c.b16 %v2148, %v2146
  %v2173 = vpack.c.b16 %v2149, %v2147
  %v2174 = vpack.c.b16 %v2152, %v2150
  %v2175 = vpack.c.b16 %v2153, %v2151
  %v2176 = vpack.c.b16 %v2156, %v2154
  %v2177 = vpack.c.b16 %v2157, %v2155
  %v2178 = vpack.c.b16 %v2160, %v2158
  %v2179 = vpack.c.b16 %v2161, %v2159
  %v2180 = vpack.c.b16 %v2164, %v2162
  %v2181 = vpack.c.b16 %v2165, %v2163
  %2198 = vmatprep.subr.bf16.mxu0 %v2167
  %2199 = vmatpush1.bf16.msra.mxu0 %v2166
  %2200 = vmatprep.subr.bf16.mxu0 %v2169
  %2201 = vmatpush1.bf16.msra.mxu0 %v2168
  %2202 = vmatprep.subr.bf16.mxu0 %v2171
  %2203 = vmatpush1.bf16.msra.mxu0 %v2170
  %2204 = vmatprep.subr.bf16.mxu0 %v2173
  %2205 = vmatpush1.bf16.msra.mxu0 %v2172
  %2206 = vmatprep.subr.bf16.mxu0 %v2175
  %2207 = vmatpush1.bf16.msra.mxu0 %v2174
  %2208 = vmatprep.subr.bf16.mxu0 %v2177
  %2209 = vmatpush1.bf16.msra.mxu0 %v2176
  %2210 = vmatprep.subr.bf16.mxu0 %v2179
  %2211 = vmatpush1.bf16.msra.mxu0 %v2178
  %2212 = vmatprep.subr.bf16.mxu0 %v2181
  %2213 = vmatpush1.bf16.msra.mxu0 %v2180
  %2214 = vmatprep.subr.bf16.mxu0 0
  %2215 = vmatpush1.bf16.msra.mxu0 0
  %2216 = vmatprep.subr.bf16.mxu0 0
  %2217 = vmatpush1.bf16.msra.mxu0 0
  %2218 = vmatprep.subr.bf16.mxu0 0
  %2219 = vmatpush1.bf16.msra.mxu0 0
  %2220 = vmatprep.subr.bf16.mxu0 0
  %2221 = vmatpush1.bf16.msra.mxu0 0
  %2222 = vmatprep.subr.bf16.mxu0 0
  %2223 = vmatpush1.bf16.msra.mxu0 0
  %2224 = vmatprep.subr.bf16.mxu0 0
  %2225 = vmatpush1.bf16.msra.mxu0 0
  %2226 = vmatprep.subr.bf16.mxu0 0
  %2227 = vmatpush1.bf16.msra.mxu0 0
  %2228 = vmatprep.subr.bf16.mxu0 0
  %2229 = vmatpush1.bf16.msra.mxu0 0
  %2230 = vmatprep.mubr.bf16.mxu0 0
  %2231 = vmatmul.mubr.bf16.gmra.mrb[0].mxu0 %v2101
  %v2232 = vpop.f32.mrb[0].mxu0
  %v2233 = vadd.f32 0.0, %v2232
  %v2234 = vpop.f32.mrb[0].mxu0
  %v2235 = vadd.f32 0.0, %v2234
  %v2236 = vpop.f32.mrb[0].mxu0
  %v2237 = vpop.f32.mrb[0].mxu0
  %2238 = vdwg.mxu0
  %v2239 = vadd.f32 %v2098, %v2233
  %v2240 = vxor.u32 %v2239, 2147483648
  %v2241 = vmul.f32 %v2240, 1.442695
  %v2242 = vpow.pop %v2241
  %v2243 = vadd.f32 %v2242, 1.0
  %v2244 = vrcp.pop %v2243
  %v2245 = vmul.f32 1.0, %v2244
  %v2246 = vadd.f32 %v2099, %v2235
  %v2247 = vxor.u32 %v2246, 2147483648
  %v2248 = vmul.f32 %v2247, 1.442695
  %v2249 = vpow.pop %v2248
  %v2250 = vadd.f32 %v2249, 1.0
  %v2251 = vrcp.pop %v2250
  %v2252 = vmul.f32 1.0, %v2251
  %v2253 = vmul.f32 %v2094, %v2252
  %v2254 = vld [vmem:[%s4] sm:$0xff]
  %v2255 = vld [vmem:[%s4 + $0x8] sm:$0xff]
  %v2256 = vld [vmem:[%s4 + $0x10] sm:$0xff]
  %v2257 = vld [vmem:[%s4 + $0x18] sm:$0xff]
  %v2258 = vld [vmem:[%s4 + $0x20] sm:$0xff]
  %v2259 = vld [vmem:[%s4 + $0x28] sm:$0xff]
  %v2260 = vld [vmem:[%s4 + $0x30] sm:$0xff]
  %v2261 = vld [vmem:[%s4 + $0x38] sm:$0xff]
  %v2262 = vld [vmem:[%s4 + $0x40] sm:$0xff]
  %v2263 = vld [vmem:[%s4 + $0x48] sm:$0xff]
  %v2264 = vld [vmem:[%s4 + $0x50] sm:$0xff]
  %v2265 = vld [vmem:[%s4 + $0x58] sm:$0xff]
  %v2266 = vld [vmem:[%s4 + $0x60] sm:$0xff]
  %v2267 = vld [vmem:[%s4 + $0x68] sm:$0xff]
  %v2268 = vld [vmem:[%s4 + $0x70] sm:$0xff]
  %v2269 = vld [vmem:[%s4 + $0x78] sm:$0xff]
  %2270 = vmatprep.subr.mxu0 0.0
  %2271 = vmatpush1.msra.mxu0 %v2254
  %2272 = vmatprep.subr.mxu0 0.0
  %2273 = vmatpush1.msra.mxu0 %v2255
  %2274 = vmatprep.subr.mxu0 0.0
  %2275 = vmatpush1.msra.mxu0 %v2256
  %2276 = vmatprep.subr.mxu0 0.0
  %2277 = vmatpush1.msra.mxu0 %v2257
  %2278 = vmatprep.subr.mxu0 0.0
  %2279 = vmatpush1.msra.mxu0 %v2258
  %2280 = vmatprep.subr.mxu0 0.0
  %2281 = vmatpush1.msra.mxu0 %v2259
  %2282 = vmatprep.subr.mxu0 0.0
  %2283 = vmatpush1.msra.mxu0 %v2260
  %2284 = vmatprep.subr.mxu0 0.0
  %2285 = vmatpush1.msra.mxu0 %v2261
  %2286 = vmatprep.subr.mxu0 0.0
  %2287 = vmatpush1.msra.mxu0 %v2262
  %2288 = vmatprep.subr.mxu0 0.0
  %2289 = vmatpush1.msra.mxu0 %v2263
  %2290 = vmatprep.subr.mxu0 0.0
  %2291 = vmatpush1.msra.mxu0 %v2264
  %2292 = vmatprep.subr.mxu0 0.0
  %2293 = vmatpush1.msra.mxu0 %v2265
  %2294 = vmatprep.subr.mxu0 0.0
  %2295 = vmatpush1.msra.mxu0 %v2266
  %2296 = vmatprep.subr.mxu0 0.0
  %2297 = vmatpush1.msra.mxu0 %v2267
  %2298 = vmatprep.subr.mxu0 0.0
  %2299 = vmatpush1.msra.mxu0 %v2268
  %2300 = vmatprep.subr.mxu0 0.0
  %2301 = vmatpush1.msra.mxu0 %v2269
  %2302 = vmatprep.subr.mxu0 0.0
  %2303 = vmatpush1.msra.mxu0 0.0
  %2304 = vmatprep.subr.mxu0 0.0
  %2305 = vmatpush1.msra.mxu0 0.0
  %2306 = vmatprep.subr.mxu0 0.0
  %2307 = vmatpush1.msra.mxu0 0.0
  %2308 = vmatprep.subr.mxu0 0.0
  %2309 = vmatpush1.msra.mxu0 0.0
  %2310 = vmatprep.subr.mxu0 0.0
  %2311 = vmatpush1.msra.mxu0 0.0
  %2312 = vmatprep.subr.mxu0 0.0
  %2313 = vmatpush1.msra.mxu0 0.0
  %2314 = vmatprep.subr.mxu0 0.0
  %2315 = vmatpush1.msra.mxu0 0.0
  %2316 = vmatprep.subr.mxu0 0.0
  %2317 = vmatpush1.msra.mxu0 0.0
  %2318 = vmatprep.subr.mxu0 0.0
  %2319 = vmatpush1.msra.mxu0 0.0
  %2320 = vmatprep.subr.mxu0 0.0
  %2321 = vmatpush1.msra.mxu0 0.0
  %2322 = vmatprep.subr.mxu0 0.0
  %2323 = vmatpush1.msra.mxu0 0.0
  %2324 = vmatprep.subr.mxu0 0.0
  %2325 = vmatpush1.msra.mxu0 0.0
  %2326 = vmatprep.subr.mxu0 0.0
  %2327 = vmatpush1.msra.mxu0 0.0
  %2328 = vmatprep.subr.mxu0 0.0
  %2329 = vmatpush1.msra.mxu0 0.0
  %2330 = vmatprep.subr.mxu0 0.0
  %2331 = vmatpush1.msra.mxu0 0.0
  %2332 = vmatprep.subr.mxu0 0.0
  %2333 = vmatpush1.msra.mxu0 0.0
  %2334 = vmatprep.mubr.f32.mxu0 0.0
  %2335 = vmatmul.mubr.f32.gmra.mrb[0].mxu0 %v2253
  %v2336 = vpop.f32.mrb[0].mxu0
  %v2337 = vadd.f32 0.0, %v2336
  %v2338 = vpop.f32.mrb[0].mxu0
  %2339 = vdwg.mxu0
  %v2340 = vadd.f32 %v2100, %v2337
  %v2341 = vtanh.pop %v2340
  %v2342 = vsub.f32 1.0, %v2245
  %v2343 = vmul.f32 %v2094, %v2342
  %v2344 = vmul.f32 %v2245, %v2341
  %v2345 = vadd.f32 %v2343, %v2344
  %s2346 = scalar_lea.vmem %s5, 56
  %2347 = vst [vmem:[%s2346] sm:$0xff] %v2345
  %2348 = vst [vmem:[#allocation2] sm:$0xff] %v2345
  // Predicated region
  $region26: #{basket_gru_forward.1} parent=0 // pred_check
    _
  $region27: #{basket_gru_forward.1} parent=0 // pred_check_branch
    %2350 = sbr.rel (0) target = $region29
  $region28: #{basket_gru_forward.1} parent=0 // pred_region
    _
  $region29: #{basket_gru_forward.1} parent=0 // pred_fallthru
    _
  // Predicated region
  $region30: #{basket_gru_forward.1} parent=0 // pred_check
    _
  $region31: #{basket_gru_forward.1} parent=0 // pred_check_branch
    %2352 = sbr.rel (0) target = $region33
  $region32: #{basket_gru_forward.1} parent=0 // pred_region
    _
  $region33: #{basket_gru_forward.1} parent=0 // pred_fallthru
    _

</llo_original>
